<compile_context>
chip_gen: v6e
topology: v6e:2x2x1
jax: 0.10.0
libtpu: 0.0.40
codegen_flags: <defaults>
</compile_context>

<pallas_src>
import functools

import jax
import jax.numpy as jnp
from jax import lax
from jax.experimental import pallas as pl
from jax.experimental.pallas import tpu as pltpu


# --------------------------------------------------------------------------
# Generation-aware sizing (v5e/v6e: 128 MiB VMEM, v7x: 64 MiB per TensorCore).
# --------------------------------------------------------------------------
def _tpu_vmem_bytes():
    try:
        info = pltpu.get_tpu_info()
        v = getattr(info, "vmem_capacity_bytes", None)
        if v:
            return int(v)
    except Exception:
        pass
    return 128 * 1024 * 1024


_VMEM_BYTES = _tpu_vmem_bytes()
_VMEM_LIMIT = max(32 * 1024 * 1024,
                  min(int(0.75 * _VMEM_BYTES), 96 * 1024 * 1024))
_BIG_VMEM = _VMEM_BYTES >= 100 * 1024 * 1024       # v5e / v6e class parts
_TM_TARGET = 512 if _BIG_VMEM else 256             # matmul row-tile target
_TQ_TARGET = 512 if _BIG_VMEM else 256             # attention query-tile target
_ATTN_BUDGET = max(4 * 1024 * 1024, int(0.45 * _VMEM_LIMIT))


# --------------------------------------------------------------------------
# Tile-size helpers (toy shapes fall back to full-extent blocks, which always
# satisfy the (8, 128) constraint; large shapes get aligned tiles).
# --------------------------------------------------------------------------
def _pick_sublane_tile(dim, target):
    """Tile for a second-to-last block dim: multiple of 8 or full extent."""
    if dim <= target:
        return dim
    t = target
    while t >= 8 and dim % t != 0:
        t //= 2
    return t if (t >= 8 and dim % t == 0) else dim


def _pick_lane_tile(dim, target):
    """Tile for a last (lane) block dim: multiple of 128 or full extent."""
    if dim <= target:
        return dim
    if dim % 128 != 0:
        return dim
    t = (target // 128) * 128
    while t >= 128 and dim % t != 0:
        t -= 128
    return t if (t >= 128 and dim % t == 0) else dim


def _attn_step_bytes(g, t_q, s_kv, dh):
    """Per-grid-step VMEM bytes: double-buffered blocks + live softmax temps."""
    qb = 2 * g * t_q * dh * 2            # bf16 q block, 2 pipeline buffers
    kvb = 2 * 2 * g * s_kv * dh * 2      # bf16 k + v blocks, 2 buffers each
    ob = 2 * t_q * g * dh * 2            # bf16 lane-dense output block, 2 buffers
    wb = 2 * t_q * s_kv * 4              # f32 head-mean block, 2 buffers
    tmp = 2 * (3 * t_q * s_kv * 4 + t_q * s_kv * 2)   # ~2 heads of s/p/w temps live
    return qb + kvb + ob + wb + tmp


def _pick_head_group(num_heads, head_dim, t_q, s_kv, budget_bytes):
    """Largest divisor of num_heads that (a) keeps the per-step working set
    under budget and (b) yields a lane-dense output block (G*Dh a multiple of
    128, or the full embed dim) so attn_output HBM stores are unmasked."""
    def lane_ok(g):
        return g == num_heads or (g * head_dim) % 128 == 0

    best = None
    for g in range(1, num_heads + 1):
        if num_heads % g or not lane_ok(g):
            continue
        if _attn_step_bytes(g, t_q, s_kv, head_dim) <= budget_bytes:
            best = g
    if best is None:
        # Nothing fits the budget: minimize VMEM with the smallest valid group.
        best = next(g for g in range(1, num_heads + 1)
                    if num_heads % g == 0 and lane_ok(g))
    return best


# --------------------------------------------------------------------------
# Kernel 1: grouped/tiled linear   y[g] = x[g] @ Wt[g] + b[g]
#   x: (G, M, K) bf16, Wt: (G, K, N) bf16 (pre-transposed), b: (G, 1, N) f32
#   -> (G, M, N) in out_dtype.  f32 MXU accumulation in a VMEM scratch.
# --------------------------------------------------------------------------
def _grouped_linear_kernel(x_ref, w_ref, b_ref, o_ref, acc_ref):
    kk = pl.program_id(3)

    @pl.when(kk == 0)
    def _():
        acc_ref[...] = jnp.zeros_like(acc_ref)

    acc_ref[...] += jnp.dot(x_ref[...], w_ref[...],
                            preferred_element_type=jnp.float32)

    @pl.when(kk == pl.num_programs(3) - 1)
    def _():
        o_ref[...] = (acc_ref[...] + b_ref[...]).astype(o_ref.dtype)


def grouped_linear(x, w_t, b, out_dtype):
    """x: (G, M, K), w_t: (G, K, N), b: (G, 1, N) -> (G, M, N) out_dtype."""
    G, M, K = x.shape
    N = w_t.shape[2]
    tm = _pick_sublane_tile(M, _TM_TARGET)
    tn = _pick_lane_tile(N, 512)
    tk = _pick_lane_tile(K, 512)
    grid = (G, M // tm, N // tn, K // tk)

    flops = 2 * G * M * K * N + G * M * N
    bytes_acc = (2 * (G * M * K + G * K * N) + 4 * G * N
                 + jnp.dtype(out_dtype).itemsize * G * M * N)

    return pl.pallas_call(
        _grouped_linear_kernel,
        out_shape=jax.ShapeDtypeStruct((G, M, N), out_dtype),
        grid_spec=pltpu.PrefetchScalarGridSpec(
            num_scalar_prefetch=0,
            grid=grid,
            in_specs=[
                pl.BlockSpec((None, tm, tk), lambda g, i, j, kk: (g, i, kk)),
                pl.BlockSpec((None, tk, tn), lambda g, i, j, kk: (g, kk, j)),
                pl.BlockSpec((None, 1, tn), lambda g, i, j, kk: (g, 0, j)),
            ],
            out_specs=pl.BlockSpec((None, tm, tn), lambda g, i, j, kk: (g, i, j)),
            scratch_shapes=[pltpu.VMEM((tm, tn), jnp.float32)],
        ),
        compiler_params=pltpu.CompilerParams(
            dimension_semantics=("parallel", "parallel", "parallel", "arbitrary"),
            vmem_limit_bytes=_VMEM_LIMIT,
        ),
        cost_estimate=pl.CostEstimate(
            flops=int(flops), transcendentals=0, bytes_accessed=int(bytes_acc)),
    )(x, w_t, b)


# --------------------------------------------------------------------------
# Kernel 2: multi-head attention core with fused head-mean of the weights.
#   q: (B, H, T, Dh) bf16 (already scaled by Dh**-0.5 via the projection)
#   k, v: (B, H, S, Dh) bf16
#   Outputs: attn_out (B, T, E) bf16 (lane-dense, heads merged into E),
#            optionally mean attention weights (B, T, S) f32.
# Grid: (B, T//Tq, H//G); the head-group axis is innermost + "arbitrary" so the
# (Tq, S) weights block stays resident in VMEM and accumulates the head sum.
# --------------------------------------------------------------------------
def _mha_kernel(q_ref, k_ref, v_ref, o_ref, *rest,
                group, head_dim, inv_heads, need_weights):
    hg = pl.program_id(2)

    w_sum = None
    for g in range(group):                       # static unroll over heads
        q_g = q_ref[g]                           # (Tq, Dh) bf16, pre-scaled
        k_g = k_ref[g]                           # (S,  Dh) bf16
        v_g = v_ref[g]                           # (S,  Dh) bf16
        s = lax.dot_general(q_g, k_g, (((1,), (1,)), ((), ())),
                            preferred_element_type=jnp.float32)      # (Tq, S)
        m = jnp.max(s, axis=-1, keepdims=True)
        p = jnp.exp(s - m)
        denom = jnp.sum(p, axis=-1, keepdims=True)
        w_g = p * pl.reciprocal(denom, approx=True)                   # (Tq, S)
        o_g = lax.dot_general(w_g.astype(v_g.dtype), v_g,
                              (((1,), (0,)), ((), ())),
                              preferred_element_type=jnp.float32)     # (Tq, Dh)
        # Store into the lane-dense (Tq, G*Dh) output block; the block's HBM
        # writeback is a single unmasked, 128-multiple store.
        o_ref[:, g * head_dim:(g + 1) * head_dim] = o_g.astype(o_ref.dtype)
        if need_weights:
            w_sum = w_g if w_sum is None else w_sum + w_g

    if need_weights:
        w_ref = rest[0]

        @pl.when(hg == 0)
        def _():
            w_ref[...] = jnp.zeros_like(w_ref)

        w_ref[...] += w_sum

        @pl.when(hg == pl.num_programs(2) - 1)
        def _():
            w_ref[...] = w_ref[...] * inv_heads


def mha_attention(q, k, v, num_heads, need_weights=True):
    B, H, T, Dh = q.shape
    S = k.shape[2]
    E = H * Dh
    Tq = _pick_sublane_tile(T, _TQ_TARGET)
    G = _pick_head_group(H, Dh, Tq, S, _ATTN_BUDGET)
    grid = (B, T // Tq, H // G)

    kernel = functools.partial(_mha_kernel, group=G, head_dim=Dh,
                               inv_heads=1.0 / H, need_weights=need_weights)

    out_shape = (jax.ShapeDtypeStruct((B, T, E), q.dtype),)
    out_specs = (pl.BlockSpec((None, Tq, G * Dh), lambda b, tq, hg: (b, tq, hg)),)
    if need_weights:
        out_shape = out_shape + (jax.ShapeDtypeStruct((B, T, S), jnp.float32),)
        out_specs = out_specs + (
            pl.BlockSpec((None, Tq, S), lambda b, tq, hg: (b, tq, 0)),)

    flops = 4 * B * H * T * S * Dh + 6 * B * H * T * S
    bytes_acc = (2 * B * H * T * Dh + (T // Tq) * 2 * 2 * B * H * S * Dh
                 + 2 * B * T * E + (4 * B * T * S if need_weights else 0))

    # NOTE(megacore): parallel axes are (B, T//Tq); the head-group axis must
    # stay "arbitrary" when weights accumulate across it.
    sem_last = "arbitrary" if need_weights else "parallel"

    results = pl.pallas_call(
        kernel,
        out_shape=out_shape,
        grid_spec=pltpu.PrefetchScalarGridSpec(
            num_scalar_prefetch=0,
            grid=grid,
            in_specs=[
                pl.BlockSpec((None, G, Tq, Dh), lambda b, tq, hg: (b, hg, tq, 0)),
                pl.BlockSpec((None, G, S, Dh), lambda b, tq, hg: (b, hg, 0, 0)),
                pl.BlockSpec((None, G, S, Dh), lambda b, tq, hg: (b, hg, 0, 0)),
            ],
            out_specs=out_specs,
        ),
        compiler_params=pltpu.CompilerParams(
            dimension_semantics=("parallel", "parallel", sem_last),
            vmem_limit_bytes=_VMEM_LIMIT,
        ),
        cost_estimate=pl.CostEstimate(
            flops=int(flops), transcendentals=int(B * H * T * S),
            bytes_accessed=int(bytes_acc)),
    )(q, k, v)

    if need_weights:
        return results[0], results[1]
    return results[0], None


# --------------------------------------------------------------------------
# Module-equivalent wrapper
# --------------------------------------------------------------------------
class MHAWithInProj:
    def __init__(self, embed_dim, num_heads, key):
        self.embed_dim = embed_dim
        self.num_heads = num_heads
        self.head_dim = embed_dim // num_heads
        assert self.head_dim * num_heads == embed_dim

        k1, k2 = jax.random.split(key, 2)
        # xavier_uniform for in_proj_weight (3E, E)
        limit_in = (6.0 / (3 * embed_dim + embed_dim)) ** 0.5
        self.in_proj_weight = jax.random.uniform(
            k1, (3 * embed_dim, embed_dim), jnp.float32, -limit_in, limit_in)
        self.in_proj_bias = jnp.zeros((3 * embed_dim,), jnp.float32)
        # out_proj Linear(E, E): deterministic uniform init, zero bias
        limit_out = (1.0 / embed_dim) ** 0.5
        self.out_proj_weight = jax.random.uniform(
            k2, (embed_dim, embed_dim), jnp.float32, -limit_out, limit_out)
        self.out_proj_bias = jnp.zeros((embed_dim,), jnp.float32)

        # ---- kernel-layout parameters (computed once at init) ----
        # Pre-transpose weights to (K, N) (no in-kernel .T), fold the 1/sqrt(Dh)
        # attention scale into the Q projection, and cast to bf16 for the MXU.
        scale = float(self.head_dim) ** (-0.5)
        w_q, w_k, w_v = jnp.split(self.in_proj_weight, 3, axis=0)
        b_q, b_k, b_v = jnp.split(self.in_proj_bias, 3, axis=0)
        self._in_w_t = jnp.stack([(w_q * scale).T, w_k.T, w_v.T]
                                 ).astype(jnp.bfloat16)                 # (3,E,E)
        self._in_b = jnp.stack([b_q * scale, b_k, b_v]).reshape(3, 1, embed_dim)
        self._out_w_t = self.out_proj_weight.T.reshape(
            1, embed_dim, embed_dim).astype(jnp.bfloat16)
        self._out_b = self.out_proj_bias.reshape(1, 1, embed_dim)

    def __call__(self, query, key, value, need_weights=True):
        # query/key/value: (T, B, E) / (S, B, E) / (S, B, E)
        T, B, E = query.shape
        S = key.shape[0]
        H, Dh = self.num_heads, self.head_dim

        q2d = query.reshape(T * B, E).astype(jnp.bfloat16)
        k2d = key.reshape(S * B, E).astype(jnp.bfloat16)
        v2d = value.reshape(S * B, E).astype(jnp.bfloat16)

        # --- fused in-projection (one Pallas call for Q, K, V) ---
        if T == S:
            x = jnp.stack([q2d, k2d, v2d])                            # (3, M, E)
            y = grouped_linear(x, self._in_w_t, self._in_b, jnp.bfloat16)
            q2, k2, v2 = y[0], y[1], y[2]
        else:
            # Cross-attention with T != S falls back to two calls.
            q2 = grouped_linear(q2d[None], self._in_w_t[0:1],
                                self._in_b[0:1], jnp.bfloat16)[0]
            kv = grouped_linear(jnp.stack([k2d, v2d]), self._in_w_t[1:3],
                                self._in_b[1:3], jnp.bfloat16)
            k2, v2 = kv[0], kv[1]

        # (seq*B, E) -> (B, H, seq, Dh)  (head-leading layout for the kernel).
        # TODO(synk): these are XLA HBM relayouts (bf16); fusing a head-major
        # out_spec into the projection needs batch-major activation rows.
        qh = q2.reshape(T, B, H, Dh).transpose(1, 2, 0, 3)
        kh = k2.reshape(S, B, H, Dh).transpose(1, 2, 0, 3)
        vh = v2.reshape(S, B, H, Dh).transpose(1, 2, 0, 3)

        # --- attention core (per-head MXU matmuls, lane-dense (B,T,E) out,
        #     fused head-mean of the weights) ---
        attn_out, attn_w = mha_attention(qh, kh, vh, H,
                                         need_weights=need_weights)

        # (B, T, E) bf16 -> (T*B, E): single relayout on bf16 data; the
        # out-projection output then reshapes to (T, B, E) for free.
        out_in = attn_out.transpose(1, 0, 2).reshape(T * B, E)

        # --- out projection (f32 output) ---
        out = grouped_linear(out_in[None], self._out_w_t, self._out_b,
                             jnp.float32)[0]
        return out.reshape(T, B, E), attn_w

    # pure-jnp f32 reference for validation (mirrors the torch module exactly)
    def reference(self, query, key, value):
        T, B, E = query.shape
        S = key.shape[0]
        H, Dh = self.num_heads, self.head_dim
        w_q, w_k, w_v = jnp.split(self.in_proj_weight, 3, axis=0)
        b_q, b_k, b_v = jnp.split(self.in_proj_bias, 3, axis=0)
        q = query @ w_q.T + b_q
        k = key @ w_k.T + b_k
        v = value @ w_v.T + b_v
        q = q.reshape(T, B * H, Dh).transpose(1, 0, 2)
        k = k.reshape(S, B * H, Dh).transpose(1, 0, 2)
        v = v.reshape(S, B * H, Dh).transpose(1, 0, 2)
        s = jnp.einsum("btd,bsd->bts", q, k) * (float(Dh) ** -0.5)
        w = jax.nn.softmax(s, axis=-1)
        o = jnp.einsum("bts,bsd->btd", w, v)
        o = o.transpose(1, 0, 2).reshape(T, B, E)
        o = o @ self.out_proj_weight.T + self.out_proj_bias
        return o, w.reshape(B, H, T, S).mean(axis=1)


if __name__ == "__main__":
    key = jax.random.PRNGKey(0)
    k_param, k_q, k_k, k_v = jax.random.split(key, 4)

    embed_dim, num_heads = 32, 4
    tgt_len, src_len, bsz = 8, 8, 2

    mha = MHAWithInProj(embed_dim, num_heads, k_param)

    query = jax.random.normal(k_q, (tgt_len, bsz, embed_dim), jnp.float32)
    kkey = jax.random.normal(k_k, (src_len, bsz, embed_dim), jnp.float32)
    value = jax.random.normal(k_v, (src_len, bsz, embed_dim), jnp.float32)

    fwd = jax.jit(mha.__call__)
    out, attn_w = fwd(query, kkey, value)
    out = jax.block_until_ready(out)
    attn_w = jax.block_until_ready(attn_w)

    ref_out, ref_w = mha.reference(query, kkey, value)
    assert out.shape == (tgt_len, bsz, embed_dim)
    assert attn_w.shape == (bsz, tgt_len, src_len)
    # Tolerances loosened for bf16 MXU matmuls (f32 accumulation) + approx recip.
    assert jnp.allclose(out, ref_out, atol=5e-2, rtol=5e-2)
    assert jnp.allclose(attn_w, ref_w, atol=2e-2, rtol=2e-2)

    print("KERNEL_OK")
</pallas_src>

<mosaic_0001>
module attributes {stable_mosaic.version = 11 : i64} {
  func.func @_grouped_linear_kernel(%arg0: i32, %arg1: i32, %arg2: i32, %arg3: i32, %arg4: memref<1x16x32xbf16, #tpu.memory_space<vmem>>, %arg5: memref<1x32x32xbf16, #tpu.memory_space<vmem>>, %arg6: memref<1x1x32xf32, #tpu.memory_space<vmem>>, %arg7: memref<1x16x32xbf16, #tpu.memory_space<vmem>>, %arg8: memref<16x32xf32, #tpu.memory_space<vmem>>) attributes {dimension_semantics = [#tpu.dimension_semantics<parallel>, #tpu.dimension_semantics<parallel>, #tpu.dimension_semantics<parallel>, #tpu.dimension_semantics<arbitrary>], iteration_bounds = array<i64: 3, 1, 1, 1>, scalar_prefetch = 0 : i64, scratch_operands = 1 : i64, tpu.core_type = #tpu.core_type<tc>, window_params = [{transform_indices = @transform_0, window_bounds = array<i64: 1, 16, 32>}, {transform_indices = @transform_1, window_bounds = array<i64: 1, 32, 32>}, {transform_indices = @transform_2, window_bounds = array<i64: 1, 1, 32>}, {transform_indices = @transform_3, window_bounds = array<i64: 1, 16, 32>}]} {
    %c0_i32 = arith.constant 0 : i32
    %0 = arith.cmpi eq, %arg3, %c0_i32 : i32
    %1 = arith.extui %0 : i1 to i32
    %c0_i32_0 = arith.constant 0 : i32
    %2 = arith.cmpi ne, %1, %c0_i32_0 : i32
    scf.if %2 {
      %cst_12 = arith.constant 0.000000e+00 : f32
      %14 = vector.broadcast %cst_12 : f32 to vector<16x32xf32>
      %c0_13 = arith.constant 0 : index
      %c0_14 = arith.constant 0 : index
      %15 = vector.load %arg8[%c0_13, %c0_14] : memref<16x32xf32, #tpu.memory_space<vmem>>, vector<16x32xf32>
      tpu.vector_store %arg8[%c0_13, %c0_14], %14 {strides = array<i32>} : memref<16x32xf32, #tpu.memory_space<vmem>>, vector<16x32xf32>,
    } else {
    }
    %c0 = arith.constant 0 : index
    %c0_1 = arith.constant 0 : index
    %3 = vector.load %arg8[%c0, %c0_1] : memref<16x32xf32, #tpu.memory_space<vmem>>, vector<16x32xf32>
    %c0_2 = arith.constant 0 : index
    %c0_3 = arith.constant 0 : index
    %c0_4 = arith.constant 0 : index
    %4 = vector.load %arg4[%c0_2, %c0_3, %c0_4] : memref<1x16x32xbf16, #tpu.memory_space<vmem>>, vector<1x16x32xbf16>
    %5 = vector.shape_cast %4 : vector<1x16x32xbf16> to vector<16x32xbf16>
    %c0_5 = arith.constant 0 : index
    %c0_6 = arith.constant 0 : index
    %c0_7 = arith.constant 0 : index
    %6 = vector.load %arg5[%c0_5, %c0_6, %c0_7] : memref<1x32x32xbf16, #tpu.memory_space<vmem>>, vector<1x32x32xbf16>
    %7 = vector.shape_cast %6 : vector<1x32x32xbf16> to vector<32x32xbf16>
    %cst = arith.constant dense<0.000000e+00> : vector<16x32xf32>
    %8 = tpu.matmul %5, %7, %cst {dimension_numbers = #tpu.dot_dimension_numbers<[1], [0], [0], [1], [0, 0, 1, 1], [], []>} : vector<16x32xbf16>, vector<32x32xbf16>, vector<16x32xf32> -> vector<16x32xf32>
    %9 = arith.addf %3, %8 : vector<16x32xf32>
    %c0_8 = arith.constant 0 : index
    %c0_9 = arith.constant 0 : index
    %10 = vector.load %arg8[%c0_8, %c0_9] : memref<16x32xf32, #tpu.memory_space<vmem>>, vector<16x32xf32>
    tpu.vector_store %arg8[%c0_8, %c0_9], %9 {strides = array<i32>} : memref<16x32xf32, #tpu.memory_space<vmem>>, vector<16x32xf32>,
    %c0_i32_10 = arith.constant 0 : i32
    %11 = arith.cmpi eq, %arg3, %c0_i32_10 : i32
    %12 = arith.extui %11 : i1 to i32
    %c0_i32_11 = arith.constant 0 : i32
    %13 = arith.cmpi ne, %12, %c0_i32_11 : i32
    scf.if %13 {
      %c0_12 = arith.constant 0 : index
      %c0_13 = arith.constant 0 : index
      %14 = vector.load %arg8[%c0_12, %c0_13] : memref<16x32xf32, #tpu.memory_space<vmem>>, vector<16x32xf32>
      %c0_14 = arith.constant 0 : index
      %c0_15 = arith.constant 0 : index
      %c0_16 = arith.constant 0 : index
      %15 = vector.load %arg6[%c0_14, %c0_15, %c0_16] : memref<1x1x32xf32, #tpu.memory_space<vmem>>, vector<1x1x32xf32>
      %16 = vector.shape_cast %15 : vector<1x1x32xf32> to vector<1x32xf32>
      %17 = vector.broadcast %16 : vector<1x32xf32> to vector<16x32xf32>
      %18 = arith.addf %14, %17 : vector<16x32xf32>
      %19 = arith.truncf %18 : vector<16x32xf32> to vector<16x32xbf16>
      %c0_17 = arith.constant 0 : index
      %c0_18 = arith.constant 0 : index
      %c0_19 = arith.constant 0 : index
      %20 = vector.load %arg7[%c0_17, %c0_18, %c0_19] : memref<1x16x32xbf16, #tpu.memory_space<vmem>>, vector<1x16x32xbf16>
      %21 = vector.shape_cast %20 : vector<1x16x32xbf16> to vector<16x32xbf16>
      %22 = vector.shape_cast %19 : vector<16x32xbf16> to vector<1x16x32xbf16>
      tpu.vector_store %arg7[%c0_17, %c0_18, %c0_19], %22 {strides = array<i32>} : memref<1x16x32xbf16, #tpu.memory_space<vmem>>, vector<1x16x32xbf16>,
    } else {
    }
    return
  }
  func.func @transform_0(%arg0: i32, %arg1: i32, %arg2: i32, %arg3: i32) -> (i32, i32, i32) {
    %c0_i32 = arith.constant 0 : i32
    return %arg0, %arg1, %arg3 : i32, i32, i32
  }
  func.func @transform_1(%arg0: i32, %arg1: i32, %arg2: i32, %arg3: i32) -> (i32, i32, i32) {
    %c0_i32 = arith.constant 0 : i32
    return %arg0, %arg3, %arg2 : i32, i32, i32
  }
  func.func @transform_2(%arg0: i32, %arg1: i32, %arg2: i32, %arg3: i32) -> (i32, i32, i32) {
    %c0_i32 = arith.constant 0 : i32
    %c0_i32_0 = arith.constant 0 : i32
    return %arg0, %c0_i32, %arg2 : i32, i32, i32
  }
  func.func @transform_3(%arg0: i32, %arg1: i32, %arg2: i32, %arg3: i32) -> (i32, i32, i32) {
    %c0_i32 = arith.constant 0 : i32
    return %arg0, %arg1, %arg2 : i32, i32, i32
  }
}

module attributes {stable_mosaic.version = 11 : i64} {
  func.func @_mha_kernel(%arg0: i32, %arg1: i32, %arg2: i32, %arg3: memref<1x4x8x8xbf16, #tpu.memory_space<vmem>>, %arg4: memref<1x4x8x8xbf16, #tpu.memory_space<vmem>>, %arg5: memref<1x4x8x8xbf16, #tpu.memory_space<vmem>>, %arg6: memref<1x8x32xbf16, #tpu.memory_space<vmem>>, %arg7: memref<1x8x8xf32, #tpu.memory_space<vmem>>) attributes {dimension_semantics = [#tpu.dimension_semantics<parallel>, #tpu.dimension_semantics<parallel>, #tpu.dimension_semantics<arbitrary>], iteration_bounds = array<i64: 2, 1, 1>, scalar_prefetch = 0 : i64, scratch_operands = 0 : i64, tpu.core_type = #tpu.core_type<tc>, window_params = [{transform_indices = @transform_0, window_bounds = array<i64: 1, 4, 8, 8>}, {transform_indices = @transform_1, window_bounds = array<i64: 1, 4, 8, 8>}, {transform_indices = @transform_2, window_bounds = array<i64: 1, 4, 8, 8>}, {transform_indices = @transform_3, window_bounds = array<i64: 1, 8, 32>}, {transform_indices = @transform_4, window_bounds = array<i64: 1, 8, 8>}]} {
    %c0 = arith.constant 0 : index
    %c0_0 = arith.constant 0 : index
    %c0_1 = arith.constant 0 : index
    %c0_2 = arith.constant 0 : index
    %0 = vector.load %arg3[%c0, %c0_0, %c0_1, %c0_2] : memref<1x4x8x8xbf16, #tpu.memory_space<vmem>>, vector<1x1x8x8xbf16>
    %1 = vector.shape_cast %0 : vector<1x1x8x8xbf16> to vector<8x8xbf16>
    %c0_3 = arith.constant 0 : index
    %c0_4 = arith.constant 0 : index
    %c0_5 = arith.constant 0 : index
    %c0_6 = arith.constant 0 : index
    %2 = vector.load %arg4[%c0_3, %c0_4, %c0_5, %c0_6] : memref<1x4x8x8xbf16, #tpu.memory_space<vmem>>, vector<1x1x8x8xbf16>
    %3 = vector.shape_cast %2 : vector<1x1x8x8xbf16> to vector<8x8xbf16>
    %c0_7 = arith.constant 0 : index
    %c0_8 = arith.constant 0 : index
    %c0_9 = arith.constant 0 : index
    %c0_10 = arith.constant 0 : index
    %4 = vector.load %arg5[%c0_7, %c0_8, %c0_9, %c0_10] : memref<1x4x8x8xbf16, #tpu.memory_space<vmem>>, vector<1x1x8x8xbf16>
    %5 = vector.shape_cast %4 : vector<1x1x8x8xbf16> to vector<8x8xbf16>
    %cst = arith.constant dense<0.000000e+00> : vector<8x8xf32>
    %6 = tpu.matmul %1, %3, %cst {dimension_numbers = #tpu.dot_dimension_numbers<[1], [1], [0], [0], [0, 0, 1, 0], [], []>} : vector<8x8xbf16>, vector<8x8xbf16>, vector<8x8xf32> -> vector<8x8xf32>
    %cst_11 = arith.constant dense<0xFF800000> : vector<8xf32>
    %7 = vector.multi_reduction <maximumf>, %6, %cst_11 [1] : vector<8x8xf32> to vector<8xf32>
    %8 = vector.shape_cast %7 : vector<8xf32> to vector<8x1xf32>
    %9 = vector.broadcast %8 : vector<8x1xf32> to vector<8x8xf32>
    %10 = arith.subf %6, %9 : vector<8x8xf32>
    %11 = math.exp %10 : vector<8x8xf32>
    %cst_12 = arith.constant dense<0.000000e+00> : vector<8xf32>
    %12 = vector.multi_reduction <add>, %11, %cst_12 [1] : vector<8x8xf32> to vector<8xf32>
    %13 = vector.shape_cast %12 : vector<8xf32> to vector<8x1xf32>
    %14 = tpu.reciprocal %13 {approx = true} : vector<8x1xf32> -> vector<8x1xf32>
    %15 = vector.broadcast %14 : vector<8x1xf32> to vector<8x8xf32>
    %16 = arith.mulf %11, %15 : vector<8x8xf32>
    %17 = arith.truncf %16 : vector<8x8xf32> to vector<8x8xbf16>
    %cst_13 = arith.constant dense<0.000000e+00> : vector<8x8xf32>
    %18 = tpu.matmul %17, %5, %cst_13 {dimension_numbers = #tpu.dot_dimension_numbers<[1], [0], [0], [1], [0, 0, 1, 1], [], []>} : vector<8x8xbf16>, vector<8x8xbf16>, vector<8x8xf32> -> vector<8x8xf32>
    %19 = arith.truncf %18 : vector<8x8xf32> to vector<8x8xbf16>
    %c0_14 = arith.constant 0 : index
    %c0_15 = arith.constant 0 : index
    %c0_16 = arith.constant 0 : index
    %20 = vector.load %arg6[%c0_14, %c0_15, %c0_16] : memref<1x8x32xbf16, #tpu.memory_space<vmem>>, vector<1x8x8xbf16>
    %21 = vector.shape_cast %20 : vector<1x8x8xbf16> to vector<8x8xbf16>
    %22 = vector.shape_cast %19 : vector<8x8xbf16> to vector<1x8x8xbf16>
    tpu.vector_store %arg6[%c0_14, %c0_15, %c0_16], %22 {strides = array<i32>} : memref<1x8x32xbf16, #tpu.memory_space<vmem>>, vector<1x8x8xbf16>,
    %c0_17 = arith.constant 0 : index
    %c1 = arith.constant 1 : index
    %c0_18 = arith.constant 0 : index
    %c0_19 = arith.constant 0 : index
    %23 = vector.load %arg3[%c0_17, %c1, %c0_18, %c0_19] : memref<1x4x8x8xbf16, #tpu.memory_space<vmem>>, vector<1x1x8x8xbf16>
    %24 = vector.shape_cast %23 : vector<1x1x8x8xbf16> to vector<8x8xbf16>
    %c0_20 = arith.constant 0 : index
    %c1_21 = arith.constant 1 : index
    %c0_22 = arith.constant 0 : index
    %c0_23 = arith.constant 0 : index
    %25 = vector.load %arg4[%c0_20, %c1_21, %c0_22, %c0_23] : memref<1x4x8x8xbf16, #tpu.memory_space<vmem>>, vector<1x1x8x8xbf16>
    %26 = vector.shape_cast %25 : vector<1x1x8x8xbf16> to vector<8x8xbf16>
    %c0_24 = arith.constant 0 : index
    %c1_25 = arith.constant 1 : index
    %c0_26 = arith.constant 0 : index
    %c0_27 = arith.constant 0 : index
    %27 = vector.load %arg5[%c0_24, %c1_25, %c0_26, %c0_27] : memref<1x4x8x8xbf16, #tpu.memory_space<vmem>>, vector<1x1x8x8xbf16>
    %28 = vector.shape_cast %27 : vector<1x1x8x8xbf16> to vector<8x8xbf16>
    %cst_28 = arith.constant dense<0.000000e+00> : vector<8x8xf32>
    %29 = tpu.matmul %24, %26, %cst_28 {dimension_numbers = #tpu.dot_dimension_numbers<[1], [1], [0], [0], [0, 0, 1, 0], [], []>} : vector<8x8xbf16>, vector<8x8xbf16>, vector<8x8xf32> -> vector<8x8xf32>
    %cst_29 = arith.constant dense<0xFF800000> : vector<8xf32>
    %30 = vector.multi_reduction <maximumf>, %29, %cst_29 [1] : vector<8x8xf32> to vector<8xf32>
    %31 = vector.shape_cast %30 : vector<8xf32> to vector<8x1xf32>
    %32 = vector.broadcast %31 : vector<8x1xf32> to vector<8x8xf32>
    %33 = arith.subf %29, %32 : vector<8x8xf32>
    %34 = math.exp %33 : vector<8x8xf32>
    %cst_30 = arith.constant dense<0.000000e+00> : vector<8xf32>
    %35 = vector.multi_reduction <add>, %34, %cst_30 [1] : vector<8x8xf32> to vector<8xf32>
    %36 = vector.shape_cast %35 : vector<8xf32> to vector<8x1xf32>
    %37 = tpu.reciprocal %36 {approx = true} : vector<8x1xf32> -> vector<8x1xf32>
    %38 = vector.broadcast %37 : vector<8x1xf32> to vector<8x8xf32>
    %39 = arith.mulf %34, %38 : vector<8x8xf32>
    %40 = arith.truncf %39 : vector<8x8xf32> to vector<8x8xbf16>
    %cst_31 = arith.constant dense<0.000000e+00> : vector<8x8xf32>
    %41 = tpu.matmul %40, %28, %cst_31 {dimension_numbers = #tpu.dot_dimension_numbers<[1], [0], [0], [1], [0, 0, 1, 1], [], []>} : vector<8x8xbf16>, vector<8x8xbf16>, vector<8x8xf32> -> vector<8x8xf32>
    %42 = arith.truncf %41 : vector<8x8xf32> to vector<8x8xbf16>
    %c0_32 = arith.constant 0 : index
    %c0_33 = arith.constant 0 : index
    %c8 = arith.constant 8 : index
    %43 = vector.load %arg6[%c0_32, %c0_33, %c8] : memref<1x8x32xbf16, #tpu.memory_space<vmem>>, vector<1x8x8xbf16>
    %44 = vector.shape_cast %43 : vector<1x8x8xbf16> to vector<8x8xbf16>
    %45 = vector.shape_cast %42 : vector<8x8xbf16> to vector<1x8x8xbf16>
    tpu.vector_store %arg6[%c0_32, %c0_33, %c8], %45 {strides = array<i32>} : memref<1x8x32xbf16, #tpu.memory_space<vmem>>, vector<1x8x8xbf16>,
    %46 = arith.addf %16, %39 : vector<8x8xf32>
    %c0_34 = arith.constant 0 : index
    %c2 = arith.constant 2 : index
    %c0_35 = arith.constant 0 : index
    %c0_36 = arith.constant 0 : index
    %47 = vector.load %arg3[%c0_34, %c2, %c0_35, %c0_36] : memref<1x4x8x8xbf16, #tpu.memory_space<vmem>>, vector<1x1x8x8xbf16>
    %48 = vector.shape_cast %47 : vector<1x1x8x8xbf16> to vector<8x8xbf16>
    %c0_37 = arith.constant 0 : index
    %c2_38 = arith.constant 2 : index
    %c0_39 = arith.constant 0 : index
    %c0_40 = arith.constant 0 : index
    %49 = vector.load %arg4[%c0_37, %c2_38, %c0_39, %c0_40] : memref<1x4x8x8xbf16, #tpu.memory_space<vmem>>, vector<1x1x8x8xbf16>
    %50 = vector.shape_cast %49 : vector<1x1x8x8xbf16> to vector<8x8xbf16>
    %c0_41 = arith.constant 0 : index
    %c2_42 = arith.constant 2 : index
    %c0_43 = arith.constant 0 : index
    %c0_44 = arith.constant 0 : index
    %51 = vector.load %arg5[%c0_41, %c2_42, %c0_43, %c0_44] : memref<1x4x8x8xbf16, #tpu.memory_space<vmem>>, vector<1x1x8x8xbf16>
    %52 = vector.shape_cast %51 : vector<1x1x8x8xbf16> to vector<8x8xbf16>
    %cst_45 = arith.constant dense<0.000000e+00> : vector<8x8xf32>
    %53 = tpu.matmul %48, %50, %cst_45 {dimension_numbers = #tpu.dot_dimension_numbers<[1], [1], [0], [0], [0, 0, 1, 0], [], []>} : vector<8x8xbf16>, vector<8x8xbf16>, vector<8x8xf32> -> vector<8x8xf32>
    %cst_46 = arith.constant dense<0xFF800000> : vector<8xf32>
    %54 = vector.multi_reduction <maximumf>, %53, %cst_46 [1] : vector<8x8xf32> to vector<8xf32>
    %55 = vector.shape_cast %54 : vector<8xf32> to vector<8x1xf32>
    %56 = vector.broadcast %55 : vector<8x1xf32> to vector<8x8xf32>
    %57 = arith.subf %53, %56 : vector<8x8xf32>
    %58 = math.exp %57 : vector<8x8xf32>
    %cst_47 = arith.constant dense<0.000000e+00> : vector<8xf32>
    %59 = vector.multi_reduction <add>, %58, %cst_47 [1] : vector<8x8xf32> to vector<8xf32>
    %60 = vector.shape_cast %59 : vector<8xf32> to vector<8x1xf32>
    %61 = tpu.reciprocal %60 {approx = true} : vector<8x1xf32> -> vector<8x1xf32>
    %62 = vector.broadcast %61 : vector<8x1xf32> to vector<8x8xf32>
    %63 = arith.mulf %58, %62 : vector<8x8xf32>
    %64 = arith.truncf %63 : vector<8x8xf32> to vector<8x8xbf16>
    %cst_48 = arith.constant dense<0.000000e+00> : vector<8x8xf32>
    %65 = tpu.matmul %64, %52, %cst_48 {dimension_numbers = #tpu.dot_dimension_numbers<[1], [0], [0], [1], [0, 0, 1, 1], [], []>} : vector<8x8xbf16>, vector<8x8xbf16>, vector<8x8xf32> -> vector<8x8xf32>
    %66 = arith.truncf %65 : vector<8x8xf32> to vector<8x8xbf16>
    %c0_49 = arith.constant 0 : index
    %c0_50 = arith.constant 0 : index
    %c16 = arith.constant 16 : index
    %67 = vector.load %arg6[%c0_49, %c0_50, %c16] : memref<1x8x32xbf16, #tpu.memory_space<vmem>>, vector<1x8x8xbf16>
    %68 = vector.shape_cast %67 : vector<1x8x8xbf16> to vector<8x8xbf16>
    %69 = vector.shape_cast %66 : vector<8x8xbf16> to vector<1x8x8xbf16>
    tpu.vector_store %arg6[%c0_49, %c0_50, %c16], %69 {strides = array<i32>} : memref<1x8x32xbf16, #tpu.memory_space<vmem>>, vector<1x8x8xbf16>,
    %70 = arith.addf %46, %63 : vector<8x8xf32>
    %c0_51 = arith.constant 0 : index
    %c3 = arith.constant 3 : index
    %c0_52 = arith.constant 0 : index
    %c0_53 = arith.constant 0 : index
    %71 = vector.load %arg3[%c0_51, %c3, %c0_52, %c0_53] : memref<1x4x8x8xbf16, #tpu.memory_space<vmem>>, vector<1x1x8x8xbf16>
    %72 = vector.shape_cast %71 : vector<1x1x8x8xbf16> to vector<8x8xbf16>
    %c0_54 = arith.constant 0 : index
    %c3_55 = arith.constant 3 : index
    %c0_56 = arith.constant 0 : index
    %c0_57 = arith.constant 0 : index
    %73 = vector.load %arg4[%c0_54, %c3_55, %c0_56, %c0_57] : memref<1x4x8x8xbf16, #tpu.memory_space<vmem>>, vector<1x1x8x8xbf16>
    %74 = vector.shape_cast %73 : vector<1x1x8x8xbf16> to vector<8x8xbf16>
    %c0_58 = arith.constant 0 : index
    %c3_59 = arith.constant 3 : index
    %c0_60 = arith.constant 0 : index
    %c0_61 = arith.constant 0 : index
    %75 = vector.load %arg5[%c0_58, %c3_59, %c0_60, %c0_61] : memref<1x4x8x8xbf16, #tpu.memory_space<vmem>>, vector<1x1x8x8xbf16>
    %76 = vector.shape_cast %75 : vector<1x1x8x8xbf16> to vector<8x8xbf16>
    %cst_62 = arith.constant dense<0.000000e+00> : vector<8x8xf32>
    %77 = tpu.matmul %72, %74, %cst_62 {dimension_numbers = #tpu.dot_dimension_numbers<[1], [1], [0], [0], [0, 0, 1, 0], [], []>} : vector<8x8xbf16>, vector<8x8xbf16>, vector<8x8xf32> -> vector<8x8xf32>
    %cst_63 = arith.constant dense<0xFF800000> : vector<8xf32>
    %78 = vector.multi_reduction <maximumf>, %77, %cst_63 [1] : vector<8x8xf32> to vector<8xf32>
    %79 = vector.shape_cast %78 : vector<8xf32> to vector<8x1xf32>
    %80 = vector.broadcast %79 : vector<8x1xf32> to vector<8x8xf32>
    %81 = arith.subf %77, %80 : vector<8x8xf32>
    %82 = math.exp %81 : vector<8x8xf32>
    %cst_64 = arith.constant dense<0.000000e+00> : vector<8xf32>
    %83 = vector.multi_reduction <add>, %82, %cst_64 [1] : vector<8x8xf32> to vector<8xf32>
    %84 = vector.shape_cast %83 : vector<8xf32> to vector<8x1xf32>
    %85 = tpu.reciprocal %84 {approx = true} : vector<8x1xf32> -> vector<8x1xf32>
    %86 = vector.broadcast %85 : vector<8x1xf32> to vector<8x8xf32>
    %87 = arith.mulf %82, %86 : vector<8x8xf32>
    %88 = arith.truncf %87 : vector<8x8xf32> to vector<8x8xbf16>
    %cst_65 = arith.constant dense<0.000000e+00> : vector<8x8xf32>
    %89 = tpu.matmul %88, %76, %cst_65 {dimension_numbers = #tpu.dot_dimension_numbers<[1], [0], [0], [1], [0, 0, 1, 1], [], []>} : vector<8x8xbf16>, vector<8x8xbf16>, vector<8x8xf32> -> vector<8x8xf32>
    %90 = arith.truncf %89 : vector<8x8xf32> to vector<8x8xbf16>
    %c0_66 = arith.constant 0 : index
    %c0_67 = arith.constant 0 : index
    %c24 = arith.constant 24 : index
    %91 = vector.load %arg6[%c0_66, %c0_67, %c24] : memref<1x8x32xbf16, #tpu.memory_space<vmem>>, vector<1x8x8xbf16>
    %92 = vector.shape_cast %91 : vector<1x8x8xbf16> to vector<8x8xbf16>
    %93 = vector.shape_cast %90 : vector<8x8xbf16> to vector<1x8x8xbf16>
    tpu.vector_store %arg6[%c0_66, %c0_67, %c24], %93 {strides = array<i32>} : memref<1x8x32xbf16, #tpu.memory_space<vmem>>, vector<1x8x8xbf16>,
    %94 = arith.addf %70, %87 : vector<8x8xf32>
    %c0_i32 = arith.constant 0 : i32
    %95 = arith.cmpi eq, %arg2, %c0_i32 : i32
    %96 = arith.extui %95 : i1 to i32
    %c0_i32_68 = arith.constant 0 : i32
    %97 = arith.cmpi ne, %96, %c0_i32_68 : i32
    scf.if %97 {
      %cst_77 = arith.constant 0.000000e+00 : f32
      %107 = vector.broadcast %cst_77 : f32 to vector<8x8xf32>
      %c0_78 = arith.constant 0 : index
      %c0_79 = arith.constant 0 : index
      %c0_80 = arith.constant 0 : index
      %108 = vector.load %arg7[%c0_78, %c0_79, %c0_80] : memref<1x8x8xf32, #tpu.memory_space<vmem>>, vector<1x8x8xf32>
      %109 = vector.shape_cast %108 : vector<1x8x8xf32> to vector<8x8xf32>
      %110 = vector.shape_cast %107 : vector<8x8xf32> to vector<1x8x8xf32>
      tpu.vector_store %arg7[%c0_78, %c0_79, %c0_80], %110 {strides = array<i32>} : memref<1x8x8xf32, #tpu.memory_space<vmem>>, vector<1x8x8xf32>,
    } else {
    }
    %c0_69 = arith.constant 0 : index
    %c0_70 = arith.constant 0 : index
    %c0_71 = arith.constant 0 : index
    %98 = vector.load %arg7[%c0_69, %c0_70, %c0_71] : memref<1x8x8xf32, #tpu.memory_space<vmem>>, vector<1x8x8xf32>
    %99 = vector.shape_cast %98 : vector<1x8x8xf32> to vector<8x8xf32>
    %100 = arith.addf %99, %94 : vector<8x8xf32>
    %c0_72 = arith.constant 0 : index
    %c0_73 = arith.constant 0 : index
    %c0_74 = arith.constant 0 : index
    %101 = vector.load %arg7[%c0_72, %c0_73, %c0_74] : memref<1x8x8xf32, #tpu.memory_space<vmem>>, vector<1x8x8xf32>
    %102 = vector.shape_cast %101 : vector<1x8x8xf32> to vector<8x8xf32>
    %103 = vector.shape_cast %100 : vector<8x8xf32> to vector<1x8x8xf32>
    tpu.vector_store %arg7[%c0_72, %c0_73, %c0_74], %103 {strides = array<i32>} : memref<1x8x8xf32, #tpu.memory_space<vmem>>, vector<1x8x8xf32>,
    %c0_i32_75 = arith.constant 0 : i32
    %104 = arith.cmpi eq, %arg2, %c0_i32_75 : i32
    %105 = arith.extui %104 : i1 to i32
    %c0_i32_76 = arith.constant 0 : i32
    %106 = arith.cmpi ne, %105, %c0_i32_76 : i32
    scf.if %106 {
      %c0_77 = arith.constant 0 : index
      %c0_78 = arith.constant 0 : index
      %c0_79 = arith.constant 0 : index
      %107 = vector.load %arg7[%c0_77, %c0_78, %c0_79] : memref<1x8x8xf32, #tpu.memory_space<vmem>>, vector<1x8x8xf32>
      %108 = vector.shape_cast %107 : vector<1x8x8xf32> to vector<8x8xf32>
      %cst_80 = arith.constant 2.500000e-01 : f32
      %109 = vector.broadcast %cst_80 : f32 to vector<8x8xf32>
      %110 = arith.mulf %108, %109 : vector<8x8xf32>
      %c0_81 = arith.constant 0 : index
      %c0_82 = arith.constant 0 : index
      %c0_83 = arith.constant 0 : index
      %111 = vector.load %arg7[%c0_81, %c0_82, %c0_83] : memref<1x8x8xf32, #tpu.memory_space<vmem>>, vector<1x8x8xf32>
      %112 = vector.shape_cast %111 : vector<1x8x8xf32> to vector<8x8xf32>
      %113 = vector.shape_cast %110 : vector<8x8xf32> to vector<1x8x8xf32>
      tpu.vector_store %arg7[%c0_81, %c0_82, %c0_83], %113 {strides = array<i32>} : memref<1x8x8xf32, #tpu.memory_space<vmem>>, vector<1x8x8xf32>,
    } else {
    }
    return
  }
  func.func @transform_0(%arg0: i32, %arg1: i32, %arg2: i32) -> (i32, i32, i32, i32) {
    %c0_i32 = arith.constant 0 : i32
    %c0_i32_0 = arith.constant 0 : i32
    return %arg0, %arg2, %arg1, %c0_i32 : i32, i32, i32, i32
  }
  func.func @transform_1(%arg0: i32, %arg1: i32, %arg2: i32) -> (i32, i32, i32, i32) {
    %c0_i32 = arith.constant 0 : i32
    %c0_i32_0 = arith.constant 0 : i32
    %c0_i32_1 = arith.constant 0 : i32
    return %arg0, %arg2, %c0_i32, %c0_i32_0 : i32, i32, i32, i32
  }
  func.func @transform_2(%arg0: i32, %arg1: i32, %arg2: i32) -> (i32, i32, i32, i32) {
    %c0_i32 = arith.constant 0 : i32
    %c0_i32_0 = arith.constant 0 : i32
    %c0_i32_1 = arith.constant 0 : i32
    return %arg0, %arg2, %c0_i32, %c0_i32_0 : i32, i32, i32, i32
  }
  func.func @transform_3(%arg0: i32, %arg1: i32, %arg2: i32) -> (i32, i32, i32) {
    %c0_i32 = arith.constant 0 : i32
    return %arg0, %arg1, %arg2 : i32, i32, i32
  }
  func.func @transform_4(%arg0: i32, %arg1: i32, %arg2: i32) -> (i32, i32, i32) {
    %c0_i32 = arith.constant 0 : i32
    %c0_i32_0 = arith.constant 0 : i32
    return %arg0, %arg1, %c0_i32 : i32, i32, i32
  }
}

module attributes {stable_mosaic.version = 11 : i64} {
  func.func @_grouped_linear_kernel(%arg0: i32, %arg1: i32, %arg2: i32, %arg3: i32, %arg4: memref<1x16x32xbf16, #tpu.memory_space<vmem>>, %arg5: memref<1x32x32xbf16, #tpu.memory_space<vmem>>, %arg6: memref<1x1x32xf32, #tpu.memory_space<vmem>>, %arg7: memref<1x16x32xf32, #tpu.memory_space<vmem>>, %arg8: memref<16x32xf32, #tpu.memory_space<vmem>>) attributes {dimension_semantics = [#tpu.dimension_semantics<parallel>, #tpu.dimension_semantics<parallel>, #tpu.dimension_semantics<parallel>, #tpu.dimension_semantics<arbitrary>], iteration_bounds = array<i64: 1, 1, 1, 1>, scalar_prefetch = 0 : i64, scratch_operands = 1 : i64, tpu.core_type = #tpu.core_type<tc>, window_params = [{transform_indices = @transform_0, window_bounds = array<i64: 1, 16, 32>}, {transform_indices = @transform_1, window_bounds = array<i64: 1, 32, 32>}, {transform_indices = @transform_2, window_bounds = array<i64: 1, 1, 32>}, {transform_indices = @transform_3, window_bounds = array<i64: 1, 16, 32>}]} {
    %c0_i32 = arith.constant 0 : i32
    %0 = arith.cmpi eq, %arg3, %c0_i32 : i32
    %1 = arith.extui %0 : i1 to i32
    %c0_i32_0 = arith.constant 0 : i32
    %2 = arith.cmpi ne, %1, %c0_i32_0 : i32
    scf.if %2 {
      %cst_12 = arith.constant 0.000000e+00 : f32
      %14 = vector.broadcast %cst_12 : f32 to vector<16x32xf32>
      %c0_13 = arith.constant 0 : index
      %c0_14 = arith.constant 0 : index
      %15 = vector.load %arg8[%c0_13, %c0_14] : memref<16x32xf32, #tpu.memory_space<vmem>>, vector<16x32xf32>
      tpu.vector_store %arg8[%c0_13, %c0_14], %14 {strides = array<i32>} : memref<16x32xf32, #tpu.memory_space<vmem>>, vector<16x32xf32>,
    } else {
    }
    %c0 = arith.constant 0 : index
    %c0_1 = arith.constant 0 : index
    %3 = vector.load %arg8[%c0, %c0_1] : memref<16x32xf32, #tpu.memory_space<vmem>>, vector<16x32xf32>
    %c0_2 = arith.constant 0 : index
    %c0_3 = arith.constant 0 : index
    %c0_4 = arith.constant 0 : index
    %4 = vector.load %arg4[%c0_2, %c0_3, %c0_4] : memref<1x16x32xbf16, #tpu.memory_space<vmem>>, vector<1x16x32xbf16>
    %5 = vector.shape_cast %4 : vector<1x16x32xbf16> to vector<16x32xbf16>
    %c0_5 = arith.constant 0 : index
    %c0_6 = arith.constant 0 : index
    %c0_7 = arith.constant 0 : index
    %6 = vector.load %arg5[%c0_5, %c0_6, %c0_7] : memref<1x32x32xbf16, #tpu.memory_space<vmem>>, vector<1x32x32xbf16>
    %7 = vector.shape_cast %6 : vector<1x32x32xbf16> to vector<32x32xbf16>
    %cst = arith.constant dense<0.000000e+00> : vector<16x32xf32>
    %8 = tpu.matmul %5, %7, %cst {dimension_numbers = #tpu.dot_dimension_numbers<[1], [0], [0], [1], [0, 0, 1, 1], [], []>} : vector<16x32xbf16>, vector<32x32xbf16>, vector<16x32xf32> -> vector<16x32xf32>
    %9 = arith.addf %3, %8 : vector<16x32xf32>
    %c0_8 = arith.constant 0 : index
    %c0_9 = arith.constant 0 : index
    %10 = vector.load %arg8[%c0_8, %c0_9] : memref<16x32xf32, #tpu.memory_space<vmem>>, vector<16x32xf32>
    tpu.vector_store %arg8[%c0_8, %c0_9], %9 {strides = array<i32>} : memref<16x32xf32, #tpu.memory_space<vmem>>, vector<16x32xf32>,
    %c0_i32_10 = arith.constant 0 : i32
    %11 = arith.cmpi eq, %arg3, %c0_i32_10 : i32
    %12 = arith.extui %11 : i1 to i32
    %c0_i32_11 = arith.constant 0 : i32
    %13 = arith.cmpi ne, %12, %c0_i32_11 : i32
    scf.if %13 {
      %c0_12 = arith.constant 0 : index
      %c0_13 = arith.constant 0 : index
      %14 = vector.load %arg8[%c0_12, %c0_13] : memref<16x32xf32, #tpu.memory_space<vmem>>, vector<16x32xf32>
      %c0_14 = arith.constant 0 : index
      %c0_15 = arith.constant 0 : index
      %c0_16 = arith.constant 0 : index
      %15 = vector.load %arg6[%c0_14, %c0_15, %c0_16] : memref<1x1x32xf32, #tpu.memory_space<vmem>>, vector<1x1x32xf32>
      %16 = vector.shape_cast %15 : vector<1x1x32xf32> to vector<1x32xf32>
      %17 = vector.broadcast %16 : vector<1x32xf32> to vector<16x32xf32>
      %18 = arith.addf %14, %17 : vector<16x32xf32>
      %c0_17 = arith.constant 0 : index
      %c0_18 = arith.constant 0 : index
      %c0_19 = arith.constant 0 : index
      %19 = vector.load %arg7[%c0_17, %c0_18, %c0_19] : memref<1x16x32xf32, #tpu.memory_space<vmem>>, vector<1x16x32xf32>
      %20 = vector.shape_cast %19 : vector<1x16x32xf32> to vector<16x32xf32>
      %21 = vector.shape_cast %18 : vector<16x32xf32> to vector<1x16x32xf32>
      tpu.vector_store %arg7[%c0_17, %c0_18, %c0_19], %21 {strides = array<i32>} : memref<1x16x32xf32, #tpu.memory_space<vmem>>, vector<1x16x32xf32>,
    } else {
    }
    return
  }
  func.func @transform_0(%arg0: i32, %arg1: i32, %arg2: i32, %arg3: i32) -> (i32, i32, i32) {
    %c0_i32 = arith.constant 0 : i32
    return %arg0, %arg1, %arg3 : i32, i32, i32
  }
  func.func @transform_1(%arg0: i32, %arg1: i32, %arg2: i32, %arg3: i32) -> (i32, i32, i32) {
    %c0_i32 = arith.constant 0 : i32
    return %arg0, %arg3, %arg2 : i32, i32, i32
  }
  func.func @transform_2(%arg0: i32, %arg1: i32, %arg2: i32, %arg3: i32) -> (i32, i32, i32) {
    %c0_i32 = arith.constant 0 : i32
    %c0_i32_0 = arith.constant 0 : i32
    return %arg0, %c0_i32, %arg2 : i32, i32, i32
  }
  func.func @transform_3(%arg0: i32, %arg1: i32, %arg2: i32, %arg3: i32) -> (i32, i32, i32) {
    %c0_i32 = arith.constant 0 : i32
    return %arg0, %arg1, %arg2 : i32, i32, i32
  }
}

</mosaic_0001>

<llo_original>
// kernel: squeeze.5
$region0: #{squeeze.5}
  %s0 = inlined_call_operand.vmem [shape: bf16[1,16,32], index: 0, kind: input, shape index: {}]
  %s1 = inlined_call_operand.vmem [shape: bf16[8,2,4,8], index: 1, kind: output, shape index: {}]
  $region1: #{squeeze.5} parent=0
    #allocation0 [shape = 'u8[65536]{0}', space=vmem, size = 0x10000, scoped, tag = 'scoped mem for output reshape']
    #allocation1 [shape = 'u8[8192]{0}', space=vmem, size = 0x2000, scoped, tag = 'scoped mem for input reshape']
    %s3 = smul.u32 4, 2
    %s4 = sshll.u32 1, %s3
    %s5 = ssub.s32 %s4, 1
    %s6 = scalar_lea.vmem %s0, 4
    %s7 = sshrl.u32 %s5, 1
    %s8 = sor.u32 %s5, %s7
    %s9 = sand.u32 %s8, 85
    %s10 = sshrl.u32 %s9, 1
    %s11 = sor.u32 %s9, %s10
    %s12 = sand.u32 51, %s11
    %s13 = sshrl.u32 %s12, 2
    %s14 = sor.u32 %s12, %s13
    %s15 = sand.u32 15, %s14
    %v16 = vld [vmem:[%s6] sm:%s15]
    %v17 = vunpack.c.l.bf16 %v16
    %v18 = vunpack.c.h.bf16 %v16
    %s19 = scalar_lea.vmem [#allocation1], 8
    %20 = vst [vmem:[%s19] sm:%s5] %v17
    %s21 = sshrl.u32 %s5, 1
    %s22 = sor.u32 %s5, %s21
    %s23 = sand.u32 %s22, 85
    %s24 = sshrl.u32 %s23, 1
    %s25 = sor.u32 %s23, %s24
    %s26 = sand.u32 51, %s25
    %s27 = sshrl.u32 %s26, 2
    %s28 = sor.u32 %s26, %s27
    %s29 = sand.u32 15, %s28
    %v30 = vld [vmem:[%s0] sm:%s29]
    %v31 = vunpack.c.l.bf16 %v30
    %v32 = vunpack.c.h.bf16 %v30
    %33 = vst [vmem:[#allocation1] sm:%s5] %v31
    %v34 = vld [vmem:[#allocation1] sm:$0xff]
    %vm35 = vcmask 64512
    %36 = vst.msk [vmem:[#allocation0] ss:$8 sm:$0xf] %vm35, %v34
    %37 = vst.msk [vmem:[#allocation0] ss:$8 sm:$0xf0] %vm35, %v34
    %s38 = scalar_lea.vmem [#allocation1], 8
    %v39 = vld [vmem:[%s38] sm:$0xff]
    %vm40 = vcmask 64512
    %s41 = scalar_lea.vmem [#allocation0], 64
    %42 = vst.msk [vmem:[%s41] ss:$8 sm:$0xf] %vm40, %v39
    %s43 = scalar_lea.vmem [#allocation0], 64
    %44 = vst.msk [vmem:[%s43] ss:$8 sm:$0xf0] %vm40, %v39
    %v45 = vld [vmem:[#allocation1] sm:$0xff]
    %46 = vrot.lane.b32.xlu0 %v45, 120
    %v47 = vpop.permute.xlu0 %46
    %vm48 = vcmask 64512
    %s49 = scalar_lea.vmem [#allocation0], 1
    %50 = vst.msk [vmem:[%s49] ss:$8 sm:$0xf] %vm48, %v47
    %s51 = scalar_lea.vmem [#allocation0], 1
    %52 = vst.msk [vmem:[%s51] ss:$8 sm:$0xf0] %vm48, %v47
    %s53 = scalar_lea.vmem [#allocation1], 8
    %v54 = vld [vmem:[%s53] sm:$0xff]
    %55 = vrot.lane.b32.xlu0 %v54, 120
    %v56 = vpop.permute.xlu0 %55
    %vm57 = vcmask 64512
    %s58 = scalar_lea.vmem [#allocation0], 65
    %59 = vst.msk [vmem:[%s58] ss:$8 sm:$0xf] %vm57, %v56
    %s60 = scalar_lea.vmem [#allocation0], 65
    %61 = vst.msk [vmem:[%s60] ss:$8 sm:$0xf0] %vm57, %v56
    %v62 = vld [vmem:[#allocation1] sm:$0xff]
    %63 = vrot.lane.b32.xlu0 %v62, 112
    %v64 = vpop.permute.xlu0 %63
    %vm65 = vcmask 64512
    %s66 = scalar_lea.vmem [#allocation0], 2
    %67 = vst.msk [vmem:[%s66] ss:$8 sm:$0xf] %vm65, %v64
    %s68 = scalar_lea.vmem [#allocation0], 2
    %69 = vst.msk [vmem:[%s68] ss:$8 sm:$0xf0] %vm65, %v64
    %s70 = scalar_lea.vmem [#allocation1], 8
    %v71 = vld [vmem:[%s70] sm:$0xff]
    %72 = vrot.lane.b32.xlu0 %v71, 112
    %v73 = vpop.permute.xlu0 %72
    %vm74 = vcmask 64512
    %s75 = scalar_lea.vmem [#allocation0], 66
    %76 = vst.msk [vmem:[%s75] ss:$8 sm:$0xf] %vm74, %v73
    %s77 = scalar_lea.vmem [#allocation0], 66
    %78 = vst.msk [vmem:[%s77] ss:$8 sm:$0xf0] %vm74, %v73
    %v79 = vld [vmem:[#allocation1] sm:$0xff]
    %80 = vrot.lane.b32.xlu0 %v79, 104
    %v81 = vpop.permute.xlu0 %80
    %vm82 = vcmask 64512
    %s83 = scalar_lea.vmem [#allocation0], 3
    %84 = vst.msk [vmem:[%s83] ss:$8 sm:$0xf] %vm82, %v81
    %s85 = scalar_lea.vmem [#allocation0], 3
    %86 = vst.msk [vmem:[%s85] ss:$8 sm:$0xf0] %vm82, %v81
    %s87 = scalar_lea.vmem [#allocation1], 8
    %v88 = vld [vmem:[%s87] sm:$0xff]
    %89 = vrot.lane.b32.xlu0 %v88, 104
    %v90 = vpop.permute.xlu0 %89
    %vm91 = vcmask 64512
    %s92 = scalar_lea.vmem [#allocation0], 67
    %93 = vst.msk [vmem:[%s92] ss:$8 sm:$0xf] %vm91, %v90
    %s94 = scalar_lea.vmem [#allocation0], 67
    %95 = vst.msk [vmem:[%s94] ss:$8 sm:$0xf0] %vm91, %v90
    %s97 = smul.u32 2, 2
    %s98 = sshll.u32 1, %s97
    %s99 = ssub.s32 %s98, 1
    %s100 = sshrl.u32 %s97, 1
    %v101 = vld [vmem:[#allocation0] sm:%s99]
    %v102 = vpack.c.bf16 0.0, %v101
    %s103 = sshll.u32 1, %s100
    %s104 = ssub.s32 %s103, 1
    %105 = vst [vmem:[%s1] sm:%s104] %v102
    %s106 = scalar_lea.vmem [#allocation0], 8
    %v107 = vld [vmem:[%s106] sm:%s99]
    %v108 = vpack.c.bf16 0.0, %v107
    %s109 = sshll.u32 1, %s100
    %s110 = ssub.s32 %s109, 1
    %s111 = scalar_lea.vmem %s1, 2
    %112 = vst [vmem:[%s111] sm:%s110] %v108
    %s113 = scalar_lea.vmem [#allocation0], 16
    %v114 = vld [vmem:[%s113] sm:%s99]
    %v115 = vpack.c.bf16 0.0, %v114
    %s116 = sshll.u32 1, %s100
    %s117 = ssub.s32 %s116, 1
    %s118 = smul.addr 2, 2
    %s119 = scalar_lea.vmem %s1, %s118
    %120 = vst [vmem:[%s119] sm:%s117] %v115
    %s121 = scalar_lea.vmem [#allocation0], 24
    %v122 = vld [vmem:[%s121] sm:%s99]
    %v123 = vpack.c.bf16 0.0, %v122
    %s124 = sshll.u32 1, %s100
    %s125 = ssub.s32 %s124, 1
    %s126 = smul.addr 2, 3
    %s127 = scalar_lea.vmem %s1, %s126
    %128 = vst [vmem:[%s127] sm:%s125] %v123
    %s129 = scalar_lea.vmem [#allocation0], 32
    %v130 = vld [vmem:[%s129] sm:%s99]
    %v131 = vpack.c.bf16 0.0, %v130
    %s132 = sshll.u32 1, %s100
    %s133 = ssub.s32 %s132, 1
    %s134 = smul.addr 2, 4
    %s135 = scalar_lea.vmem %s1, %s134
    %136 = vst [vmem:[%s135] sm:%s133] %v131
    %s137 = scalar_lea.vmem [#allocation0], 40
    %v138 = vld [vmem:[%s137] sm:%s99]
    %v139 = vpack.c.bf16 0.0, %v138
    %s140 = sshll.u32 1, %s100
    %s141 = ssub.s32 %s140, 1
    %s142 = smul.addr 2, 5
    %s143 = scalar_lea.vmem %s1, %s142
    %144 = vst [vmem:[%s143] sm:%s141] %v139
    %s145 = scalar_lea.vmem [#allocation0], 48
    %v146 = vld [vmem:[%s145] sm:%s99]
    %v147 = vpack.c.bf16 0.0, %v146
    %s148 = sshll.u32 1, %s100
    %s149 = ssub.s32 %s148, 1
    %s150 = smul.addr 2, 6
    %s151 = scalar_lea.vmem %s1, %s150
    %152 = vst [vmem:[%s151] sm:%s149] %v147
    %s153 = scalar_lea.vmem [#allocation0], 56
    %v154 = vld [vmem:[%s153] sm:%s99]
    %v155 = vpack.c.bf16 0.0, %v154
    %s156 = sshll.u32 1, %s100
    %s157 = ssub.s32 %s156, 1
    %s158 = smul.addr 2, 7
    %s159 = scalar_lea.vmem %s1, %s158
    %160 = vst [vmem:[%s159] sm:%s157] %v155
    %s161 = scalar_lea.vmem [#allocation0], 64
    %v162 = vld [vmem:[%s161] sm:%s99]
    %v163 = vpack.c.bf16 0.0, %v162
    %s164 = sshll.u32 1, %s100
    %s165 = ssub.s32 %s164, 1
    %s166 = smul.addr 2, 8
    %s167 = scalar_lea.vmem %s1, %s166
    %168 = vst [vmem:[%s167] sm:%s165] %v163
    %s169 = scalar_lea.vmem [#allocation0], 72
    %v170 = vld [vmem:[%s169] sm:%s99]
    %v171 = vpack.c.bf16 0.0, %v170
    %s172 = sshll.u32 1, %s100
    %s173 = ssub.s32 %s172, 1
    %s174 = smul.addr 2, 9
    %s175 = scalar_lea.vmem %s1, %s174
    %176 = vst [vmem:[%s175] sm:%s173] %v171
    %s177 = scalar_lea.vmem [#allocation0], 80
    %v178 = vld [vmem:[%s177] sm:%s99]
    %v179 = vpack.c.bf16 0.0, %v178
    %s180 = sshll.u32 1, %s100
    %s181 = ssub.s32 %s180, 1
    %s182 = smul.addr 2, 10
    %s183 = scalar_lea.vmem %s1, %s182
    %184 = vst [vmem:[%s183] sm:%s181] %v179
    %s185 = scalar_lea.vmem [#allocation0], 88
    %v186 = vld [vmem:[%s185] sm:%s99]
    %v187 = vpack.c.bf16 0.0, %v186
    %s188 = sshll.u32 1, %s100
    %s189 = ssub.s32 %s188, 1
    %s190 = smul.addr 2, 11
    %s191 = scalar_lea.vmem %s1, %s190
    %192 = vst [vmem:[%s191] sm:%s189] %v187
    %s193 = scalar_lea.vmem [#allocation0], 96
    %v194 = vld [vmem:[%s193] sm:%s99]
    %v195 = vpack.c.bf16 0.0, %v194
    %s196 = sshll.u32 1, %s100
    %s197 = ssub.s32 %s196, 1
    %s198 = smul.addr 2, 12
    %s199 = scalar_lea.vmem %s1, %s198
    %200 = vst [vmem:[%s199] sm:%s197] %v195
    %s201 = scalar_lea.vmem [#allocation0], 104
    %v202 = vld [vmem:[%s201] sm:%s99]
    %v203 = vpack.c.bf16 0.0, %v202
    %s204 = sshll.u32 1, %s100
    %s205 = ssub.s32 %s204, 1
    %s206 = smul.addr 2, 13
    %s207 = scalar_lea.vmem %s1, %s206
    %208 = vst [vmem:[%s207] sm:%s205] %v203
    %s209 = scalar_lea.vmem [#allocation0], 112
    %v210 = vld [vmem:[%s209] sm:%s99]
    %v211 = vpack.c.bf16 0.0, %v210
    %s212 = sshll.u32 1, %s100
    %s213 = ssub.s32 %s212, 1
    %s214 = smul.addr 2, 14
    %s215 = scalar_lea.vmem %s1, %s214
    %216 = vst [vmem:[%s215] sm:%s213] %v211
    %s217 = scalar_lea.vmem [#allocation0], 120
    %v218 = vld [vmem:[%s217] sm:%s99]
    %v219 = vpack.c.bf16 0.0, %v218
    %s220 = sshll.u32 1, %s100
    %s221 = ssub.s32 %s220, 1
    %s222 = smul.addr 2, 15
    %s223 = scalar_lea.vmem %s1, %s222
    %224 = vst [vmem:[%s223] sm:%s221] %v219

// kernel: a_call__.5
$region0: #{a_call__.5}
  #allocation0 [shape = 'u32[]', space=smem, size = 0x4, offset = 0x4, fixed_abs, tag = 'smem constant byte address 0x4 - core index']
  #allocation1 [shape = 'u32[144,128]{1,0:T(1,128)}', space=vmem, size = 0x12000, scoped, tag = 'internal scratch']
  #allocation2 [shape = 'f32[16,32]{1,0:T(8,128)}', space=vmem, size = 0x2000, scoped, tag = 'scratch operand']
  %s0 = inlined_call_operand.vmem [shape: bf16[1,16,32], index: 0, kind: input, shape index: {}]
  %s1 = inlined_call_operand.vmem [shape: bf16[1,32,32], index: 1, kind: input, shape index: {}]
  %s2 = inlined_call_operand.vmem [shape: f32[1,1,32], index: 2, kind: input, shape index: {}]
  %s3 = inlined_call_operand.hbm [shape: f32[1,16,32], index: 3, kind: output, shape index: {}]
  %s4 = sld [smem:[#allocation0]]
  $region30: #{a_call__.5} parent=0
    _
  %s6 = ssub.s32 1, %s4
  %s7 = scalar_select 0, %s6, %s4
  $region1: #{a_call__.5} parent=0
    #allocation3 [shape = 'u8[8192]{0}', space=vmem, size = 0x2000, scoped, tag = 'output window, operand 0, single buffered']
    #allocation4 [shape = 's32[1]{0}', space=sflag, size = 0x4, scoped, tag = 'scoped memory for a_call__.5']
    %8 = vsyncpa [#allocation4], 0
    // Predicated region
    $region2: #{a_call__.5} parent=1 // pred_check
      _
    $region3: #{a_call__.5} parent=1 // pred_check_branch
      %10 = sbr.rel (0) target = $region5
    $region4: #{a_call__.5} parent=1 // pred_region
      _
    $region5: #{a_call__.5} parent=1 // pred_fallthru
      _
    // Predicated region
    $region6: #{a_call__.5} parent=1 // pred_check
      _
    $region7: #{a_call__.5} parent=1 // pred_check_branch
      %12 = sbr.rel (0) target = $region9
    $region8: #{a_call__.5} parent=1 // pred_region
      _
    $region9: #{a_call__.5} parent=1 // pred_fallthru
      _
    // Predicated region
    $region10: #{a_call__.5} parent=1 // pred_check
      _
    $region11: #{a_call__.5} parent=1 // pred_check_branch
      %14 = sbr.rel (0) target = $region13
    $region12: #{a_call__.5} parent=1 // pred_region
      _
    $region13: #{a_call__.5} parent=1 // pred_fallthru
      _
    %p16 = scmp.eq.s32.totalorder 0, 0
    // Predicated region
    $region14: #{a_call__.5} parent=1 // pred_check
      %p17 = pneg %p16
    $region15: #{a_call__.5} parent=1 // pred_check_branch
      %19 = sbr.rel (%p17) target = $region17
    $region16: #{a_call__.5} parent=1 // pred_region
      %vm20 = vcmask 261120
      %21 = vst.msk [vmem:[#allocation2] sm:$0xff] %vm20, 0.0
      %22 = vst.msk [vmem:[#allocation2 + $0x8] sm:$0xff] %vm20, 0.0
    $region17: #{a_call__.5} parent=1 // pred_fallthru
      _
    %v23 = vld [vmem:[#allocation2] sm:$0xff]
    %v24 = vld [vmem:[#allocation2 + $0x8] sm:$0xff]
    %v25 = vld [vmem:[%s0] sm:$0xf]
    %v26 = vld [vmem:[%s0 + $0x4] sm:$0xf]
    %v27 = vld [vmem:[%s1] sm:$0xf]
    %v28 = vld [vmem:[%s1 + $0x4] sm:$0xf]
    %v29 = vld [vmem:[%s1 + $0x8] sm:$0xf]
    %v30 = vld [vmem:[%s1 + $0xc] sm:$0xf]
    %v33 = vunpack.c.l.b16 %v25
    %v34 = vunpack.c.l.b16 %v26
    %v35 = vpack.c.b16 %v34, %v33
    %v40 = vunpack.c.l.b16 %v27
    %v41 = vunpack.c.l.b16 %v28
    %v42 = vunpack.c.l.b16 %v29
    %v43 = vunpack.c.l.b16 %v30
    %v44 = vpack.c.b16 %v41, %v40
    %v45 = vpack.c.b16 %v43, %v42
    %vm48 = vcmask 261120
    %v50 = vsel %vm48, %v35, 0
    %52 = vmatprep.subr.bf16.mxu0 0
    %53 = vmatpush1.bf16.msra.mxu0 0
    %54 = vmatprep.subr.bf16.mxu0 0
    %55 = vmatpush1.bf16.msra.mxu0 0
    %56 = vmatprep.subr.bf16.mxu0 0
    %57 = vmatpush1.bf16.msra.mxu0 0
    %58 = vmatprep.subr.bf16.mxu0 0
    %59 = vmatpush1.bf16.msra.mxu0 0
    %60 = vmatprep.subr.bf16.mxu0 0
    %61 = vmatpush1.bf16.msra.mxu0 0
    %62 = vmatprep.subr.bf16.mxu0 0
    %63 = vmatpush1.bf16.msra.mxu0 0
    %64 = vmatprep.subr.bf16.mxu0 0
    %65 = vmatpush1.bf16.msra.mxu0 %v45
    %66 = vmatprep.subr.bf16.mxu0 0
    %67 = vmatpush1.bf16.msra.mxu0 %v44
    %68 = vmatprep.subr.bf16.mxu0 0
    %69 = vmatpush2.bf16.msra.mxu0 0
    %70 = vmatprep.subr.bf16.mxu0 0
    %71 = vmatpush2.bf16.msra.mxu0 0
    %72 = vmatprep.subr.bf16.mxu0 0
    %73 = vmatpush2.bf16.msra.mxu0 0
    %74 = vmatprep.subr.bf16.mxu0 0
    %75 = vmatpush2.bf16.msra.mxu0 0
    %76 = vmatprep.subr.bf16.mxu0 0
    %77 = vmatpush2.bf16.msra.mxu0 0
    %78 = vmatprep.subr.bf16.mxu0 0
    %79 = vmatpush2.bf16.msra.mxu0 0
    %80 = vmatprep.subr.bf16.mxu0 0
    %81 = vmatpush2.bf16.msra.mxu0 0
    %82 = vmatprep.subr.bf16.mxu0 0
    %83 = vmatpush2.bf16.msra.mxu0 0
    %84 = vmatprep.mubr.bf16.mxu0 0
    %85 = vmatmul.mubr.bf16.gmra.mxu0 %v50
    %v86 = vpop.f32.mrf.mxu0
    %v87 = vadd.f32 0.0, %v86
    %v88 = vpop.f32.mrf.mxu0
    %v89 = vpop.f32.mrf.mxu0
    %v90 = vadd.f32 0.0, %v89
    %v91 = vpop.f32.mrf.mxu0
    %92 = vdwg.mxu0
    %v93 = vadd.f32 %v23, %v87
    %v94 = vadd.f32 %v24, %v90
    %95 = vst.msk [vmem:[#allocation2] sm:$0xff] %vm48, %v93
    %96 = vst.msk [vmem:[#allocation2 + $0x8] sm:$0xff] %vm48, %v94
    // Predicated region
    $region18: #{a_call__.5} parent=1 // pred_check
      %p97 = pneg %p16
    $region19: #{a_call__.5} parent=1 // pred_check_branch
      %99 = sbr.rel (%p97) target = $region21
    $region20: #{a_call__.5} parent=1 // pred_region
      %v100 = vld [vmem:[#allocation2] sm:$0xff]
      %v101 = vld [vmem:[#allocation2 + $0x8] sm:$0xff]
      %v102 = vld [vmem:[%s2] sm:$0x1]
      %v104 = vlaneseq
      %v105 = vshrl.u32 %v104, 7
      %v106 = vsub.s32 0, %v105
      %v107 = vrot.slane %v102, %v106
      %v109 = vadd.f32 %v100, %v107
      %v110 = vadd.f32 %v101, %v107
      %111 = vst.msk [vmem:[#allocation3] sm:$0xff] %vm48, %v109
      %112 = vst.msk [vmem:[#allocation3 + $0x8] sm:$0xff] %vm48, %v110
    $region21: #{a_call__.5} parent=1 // pred_fallthru
      _
    // Predicated region
    $region22: #{a_call__.5} parent=1 // pred_check
      _
    $region23: #{a_call__.5} parent=1 // pred_check_branch
      %114 = sbr.rel (0) target = $region25
    $region24: #{a_call__.5} parent=1 // pred_region
      %s116 = ssub.s32 256, 256
      %117 = vsyncadd [#allocation4], %s116
      %s118 = sshll.u32 [#allocation3], 4
      %s119 = int_to_ptr.vmem [resolvable:$true] %s118
      %124 = dma.vmem_to_hbm [thread:$0]  %s119, 256, %s3, [#allocation4], 128, 128, 8
    $region25: #{a_call__.5} parent=1 // pred_fallthru
      _
    // Predicated region
    $region26: #{a_call__.5} parent=1 // pred_check
      _
    $region27: #{a_call__.5} parent=1 // pred_check_branch
      %126 = sbr.rel (0) target = $region29
    $region28: #{a_call__.5} parent=1 // pred_region
      %127 = dma.done [#allocation4], 256
    $region29: #{a_call__.5} parent=1 // pred_fallthru
      _
    %128 = vsyncpa [#allocation4], 1

// kernel: a_call__.3
$region0: #{a_call__.3}
  #allocation0 [shape = 'u32[]', space=smem, size = 0x4, offset = 0x4, fixed_abs, tag = 'smem constant byte address 0x4 - core index']
  #allocation1 [shape = 'u32[144,128]{1,0:T(1,128)}', space=vmem, size = 0x12000, scoped, tag = 'internal scratch']
  #allocation2 [shape = 'f32[16,32]{1,0:T(8,128)}', space=vmem, size = 0x2000, scoped, tag = 'scratch operand']
  %s0 = inlined_call_operand.vmem [shape: bf16[3,16,32], index: 0, kind: input, shape index: {}]
  %s1 = inlined_call_operand.vmem [shape: bf16[3,32,32], index: 1, kind: input, shape index: {}]
  %s2 = inlined_call_operand.vmem [shape: f32[3,1,32], index: 2, kind: input, shape index: {}]
  %s3 = inlined_call_operand.vmem [shape: bf16[3,16,32], index: 3, kind: output, shape index: {}]
  %s4 = sld [smem:[#allocation0]]
  $region53: #{a_call__.3} parent=0
    _
  %s6 = ssub.s32 1, %s4
  %s7 = scalar_select 0, %s6, %s4
  loop: start=0, step=1, limit=5
  $region2: #{a_call__.3} parent=0 // loop_pre_header
    _
  $region3: #{a_call__.3} parent=0 // loop_header
    %s9 = sphi 0, %s13
    %p10 = scmp.ge.s32.totalorder %s9, 5
    %s16 = sphi 0, %s42
    %s17 = sphi 0, %s38
    %s18 = sphi 0, %s34
    %s19 = sphi 0, %s30
    %s20 = sphi 0, %s16
    %s21 = sphi 0, %s17
    %s22 = sphi 0, %s18
    %s23 = sphi 0, %s19
    %s24 = sphi 0, %s20
    %s25 = sphi 0, %s21
    %s26 = sphi 0, %s22
    %s27 = sphi 0, %s23
    %s49 = sphi 0, %s51
    %s52 = sphi 0, %s49
    %s53 = sphi 0, %s52
    %s69 = sphi 0, %s53
    %s79 = sphi 0, %s81
    %s82 = sphi 0, %s79
    %s83 = sphi 0, %s82
    %s99 = sphi 0, %s83
    %s107 = sphi 0, %s109
    %s110 = sphi 0, %s107
    %s111 = sphi 0, %s110
    %s127 = sphi 0, %s111
    %s137 = sphi 0, %s139
    %s140 = sphi 0, %s137
    %s141 = sphi 0, %s140
    %s157 = sphi 0, %s141
  $region4: #{a_call__.3} parent=0 // loop_header_branch
    %12 = sbr.rel (%p10) target = $region8
  $region5: #{a_call__.3} parent=0 // loop_body
    %s14 = ssub.s32 %s9, 1
    %s15 = ssub.s32 %s9, 2
    %s28 = sadd.s32 1, %s19
    %p29 = scmp.ge.s32.totalorder %s28, 1
    %s30 = scalar_select %p29, 0, %s28
    %s31 = sadd.s32 1, %s18
    %s32 = scalar_select %p29, %s31, %s18
    %p33 = scmp.ge.s32.totalorder %s32, 1
    %s34 = scalar_select %p33, 0, %s32
    %s35 = sadd.s32 1, %s17
    %s36 = scalar_select %p33, %s35, %s17
    %p37 = scmp.ge.s32.totalorder %s36, 1
    %s38 = scalar_select %p37, 0, %s36
    %s39 = sadd.s32 1, %s16
    %s40 = scalar_select %p37, %s39, %s16
    %p41 = scmp.ge.s32.totalorder %s40, 3
    %s42 = scalar_select %p41, 0, %s40
    %s43 = ssub.s32 %s16, %s42
    %s44 = ssub.s32 %s17, %s38
    %s45 = sor.u32 %s43, %s44
    %s46 = ssub.s32 %s19, %s30
    %s47 = sor.u32 %s45, %s46
    %p48 = scmp.eq.s32.totalorder %s47, 0
    %s50 = sadd.s32 %s49, 1
    %s51 = scalar_select %p48, %s49, %s50
    %p54 = pneg %p48
    %p55 = scmp.eq.s32.totalorder %s9, 2
    %p56 = por %p54, %p55
    %p57 = scmp.ne.s32.totalorder %s49, %s52
    %p58 = scmp.eq.s32.totalorder %s9, 0
    %p59 = por %p57, %p58
    %p60 = scmp.ne.s32.totalorder %s49, %s52
    %p61 = scmp.eq.s32.totalorder %s14, 2
    %p62 = por %p60, %p61
    %p63 = scmp.ne.s32.totalorder %s52, %s53
    %p64 = scmp.eq.s32.totalorder %s14, 0
    %p65 = por %p63, %p64
    %p66 = scmp.ne.s32.totalorder %s52, %s53
    %p67 = scmp.eq.s32.totalorder %s15, 2
    %p68 = por %p66, %p67
    %p70 = scmp.ne.s32.totalorder %s53, %s69
    %p71 = scmp.eq.s32.totalorder %s15, 0
    %p72 = por %p70, %p71
    %s73 = ssub.s32 %s16, %s42
    %s74 = ssub.s32 %s19, %s30
    %s75 = sor.u32 %s73, %s74
    %s76 = ssub.s32 %s18, %s34
    %s77 = sor.u32 %s75, %s76
    %p78 = scmp.eq.s32.totalorder %s77, 0
    %s80 = sadd.s32 %s79, 1
    %s81 = scalar_select %p78, %s79, %s80
    %p84 = pneg %p78
    %p85 = scmp.eq.s32.totalorder %s9, 2
    %p86 = por %p84, %p85
    %p87 = scmp.ne.s32.totalorder %s79, %s82
    %p88 = scmp.eq.s32.totalorder %s9, 0
    %p89 = por %p87, %p88
    %p90 = scmp.ne.s32.totalorder %s79, %s82
    %p91 = scmp.eq.s32.totalorder %s14, 2
    %p92 = por %p90, %p91
    %p93 = scmp.ne.s32.totalorder %s82, %s83
    %p94 = scmp.eq.s32.totalorder %s14, 0
    %p95 = por %p93, %p94
    %p96 = scmp.ne.s32.totalorder %s82, %s83
    %p97 = scmp.eq.s32.totalorder %s15, 2
    %p98 = por %p96, %p97
    %p100 = scmp.ne.s32.totalorder %s83, %s99
    %p101 = scmp.eq.s32.totalorder %s15, 0
    %p102 = por %p100, %p101
    %s103 = ssub.s32 %s16, %s42
    %s104 = ssub.s32 %s18, %s34
    %s105 = sor.u32 %s103, %s104
    %p106 = scmp.eq.s32.totalorder %s105, 0
    %s108 = sadd.s32 %s107, 1
    %s109 = scalar_select %p106, %s107, %s108
    %p112 = pneg %p106
    %p113 = scmp.eq.s32.totalorder %s9, 2
    %p114 = por %p112, %p113
    %p115 = scmp.ne.s32.totalorder %s107, %s110
    %p116 = scmp.eq.s32.totalorder %s9, 0
    %p117 = por %p115, %p116
    %p118 = scmp.ne.s32.totalorder %s107, %s110
    %p119 = scmp.eq.s32.totalorder %s14, 2
    %p120 = por %p118, %p119
    %p121 = scmp.ne.s32.totalorder %s110, %s111
    %p122 = scmp.eq.s32.totalorder %s14, 0
    %p123 = por %p121, %p122
    %p124 = scmp.ne.s32.totalorder %s110, %s111
    %p125 = scmp.eq.s32.totalorder %s15, 2
    %p126 = por %p124, %p125
    %p128 = scmp.ne.s32.totalorder %s111, %s127
    %p129 = scmp.eq.s32.totalorder %s15, 0
    %p130 = por %p128, %p129
    %s131 = ssub.s32 %s16, %s42
    %s132 = ssub.s32 %s17, %s38
    %s133 = sor.u32 %s131, %s132
    %s134 = ssub.s32 %s18, %s34
    %s135 = sor.u32 %s133, %s134
    %p136 = scmp.eq.s32.totalorder %s135, 0
    %s138 = sadd.s32 %s137, 1
    %s139 = scalar_select %p136, %s137, %s138
    %p142 = pneg %p136
    %p143 = scmp.eq.s32.totalorder %s9, 2
    %p144 = por %p142, %p143
    %p145 = scmp.ne.s32.totalorder %s137, %s140
    %p146 = scmp.eq.s32.totalorder %s9, 0
    %p147 = por %p145, %p146
    %p148 = scmp.ne.s32.totalorder %s137, %s140
    %p149 = scmp.eq.s32.totalorder %s14, 2
    %p150 = por %p148, %p149
    %p151 = scmp.ne.s32.totalorder %s140, %s141
    %p152 = scmp.eq.s32.totalorder %s14, 0
    %p153 = por %p151, %p152
    %p154 = scmp.ne.s32.totalorder %s140, %s141
    %p155 = scmp.eq.s32.totalorder %s15, 2
    %p156 = por %p154, %p155
    %p158 = scmp.ne.s32.totalorder %s141, %s157
    %p159 = scmp.eq.s32.totalorder %s15, 0
    %p160 = por %p158, %p159
    %p161 = scmp.le.s32.totalorder 1, %s9
    %p162 = scmp.lt.s32.totalorder %s9, 4
    %p163 = pnand %p161, %p162
    %p164 = pneg %p163
    // Predicated region
    $region9: #{a_call__.3} parent=5 // pred_check
      _
    $region10: #{a_call__.3} parent=5 // pred_check_branch
      %166 = sbr.rel (%p163) target = $region12
    $region11: #{a_call__.3} parent=5 // pred_region
      %s167 = ssub.s32 %s9, 1
    $region12: #{a_call__.3} parent=5 // pred_fallthru
      _
    %p168 = scmp.lt.s32.totalorder %s9, 3
    // Predicated region
    $region13: #{a_call__.3} parent=5 // pred_check
      %p169 = pneg %p168
    $region14: #{a_call__.3} parent=5 // pred_check_branch
      %171 = sbr.rel (%p169) target = $region16
    $region15: #{a_call__.3} parent=5 // pred_region
      // Predicated region
      $region17: #{a_call__.3} parent=15 // pred_check
        %p172 = pneg %p59
      $region18: #{a_call__.3} parent=15 // pred_check_branch
        %174 = sbr.rel (%p172) target = $region20
      $region19: #{a_call__.3} parent=15 // pred_region
        %s175 = smul.u32 2, %s17
        %p176 = scmp.lt.s32.totalorder %s16, 2
        %s177 = scalar_select %p176, %s16, 2
        %p178 = scmp.lt.s32.totalorder %s175, 1
        %s179 = scalar_select %p178, %s175, 1
        %p180 = scmp.lt.s32.totalorder %s19, 0
        %s181 = scalar_select %p180, %s19, 0
        %s182 = sadd.s32 %s181, %s179
        %s183 = smul.addr %s177, 2
        %s184 = sadd.s32 %s182, %s183
        %s185 = smul.addr %s184, 4
        %s186 = scalar_lea.vmem %s0, %s185
        %s187 = smul.u32 2, %s17
      $region20: #{a_call__.3} parent=15 // pred_fallthru
        _
      // Predicated region
      $region21: #{a_call__.3} parent=15 // pred_check
        %p188 = pneg %p89
      $region22: #{a_call__.3} parent=15 // pred_check_branch
        %190 = sbr.rel (%p188) target = $region24
      $region23: #{a_call__.3} parent=15 // pred_region
        %s191 = smul.u32 4, %s19
        %p192 = scmp.lt.s32.totalorder %s16, 2
        %s193 = scalar_select %p192, %s16, 2
        %p194 = scmp.lt.s32.totalorder %s191, 3
        %s195 = scalar_select %p194, %s191, 3
        %p196 = scmp.lt.s32.totalorder %s18, 0
        %s197 = scalar_select %p196, %s18, 0
        %s198 = sadd.s32 %s197, %s195
        %s199 = smul.addr %s193, 4
        %s200 = sadd.s32 %s198, %s199
        %s201 = smul.addr %s200, 4
        %s202 = scalar_lea.vmem %s1, %s201
        %s203 = smul.u32 4, %s19
      $region24: #{a_call__.3} parent=15 // pred_fallthru
        _
      // Predicated region
      $region25: #{a_call__.3} parent=15 // pred_check
        %p204 = pneg %p117
      $region26: #{a_call__.3} parent=15 // pred_check_branch
        %206 = sbr.rel (%p204) target = $region28
      $region27: #{a_call__.3} parent=15 // pred_region
        %p207 = scmp.lt.s32.totalorder %s16, 2
        %s208 = scalar_select %p207, %s16, 2
        %p209 = scmp.lt.s32.totalorder %s18, 0
        %s210 = scalar_select %p209, %s18, 0
        %s211 = sadd.s32 %s210, %s208
        %s212 = scalar_lea.vmem %s2, %s211
      $region28: #{a_call__.3} parent=15 // pred_fallthru
        _
    $region16: #{a_call__.3} parent=5 // pred_fallthru
      _
    %p213 = scmp.le.s32.totalorder 1, %s9
    %p214 = scmp.lt.s32.totalorder %s9, 4
    %p215 = pnand %p213, %p214
    %p216 = pneg %p215
    // Predicated region
    $region29: #{a_call__.3} parent=5 // pred_check
      _
    $region30: #{a_call__.3} parent=5 // pred_check_branch
      %218 = sbr.rel (%p215) target = $region32
    $region31: #{a_call__.3} parent=5 // pred_region
      %s219 = ssub.s32 %s9, 1
      %s220 = smul.u32 2, %s21
      %p221 = scmp.lt.s32.totalorder %s20, 2
      %s222 = scalar_select %p221, %s20, 2
      %p223 = scmp.lt.s32.totalorder %s220, 1
      %s224 = scalar_select %p223, %s220, 1
      %p225 = scmp.lt.s32.totalorder %s23, 0
      %s226 = scalar_select %p225, %s23, 0
      %s227 = sadd.s32 %s226, %s224
      %s228 = smul.addr %s222, 2
      %s229 = sadd.s32 %s227, %s228
      %s230 = smul.addr %s229, 4
      %s231 = scalar_lea.vmem %s0, %s230
      %p232 = pneg %p65
      %p233 = pneg %p62
      %s234 = smul.u32 4, %s23
      %p235 = scmp.lt.s32.totalorder %s20, 2
      %s236 = scalar_select %p235, %s20, 2
      %p237 = scmp.lt.s32.totalorder %s234, 3
      %s238 = scalar_select %p237, %s234, 3
      %p239 = scmp.lt.s32.totalorder %s22, 0
      %s240 = scalar_select %p239, %s22, 0
      %s241 = sadd.s32 %s240, %s238
      %s242 = smul.addr %s236, 4
      %s243 = sadd.s32 %s241, %s242
      %s244 = smul.addr %s243, 4
      %s245 = scalar_lea.vmem %s1, %s244
      %p246 = pneg %p95
      %p247 = pneg %p92
      %p248 = scmp.lt.s32.totalorder %s20, 2
      %s249 = scalar_select %p248, %s20, 2
      %p250 = scmp.lt.s32.totalorder %s22, 0
      %s251 = scalar_select %p250, %s22, 0
      %s252 = sadd.s32 %s251, %s249
      %s253 = scalar_lea.vmem %s2, %s252
      %p254 = pneg %p123
      %p255 = pneg %p120
      %p256 = pneg %p153
      %p257 = pneg %p150
      %s258 = smul.u32 2, %s21
      %p259 = scmp.lt.s32.totalorder %s20, 2
      %s260 = scalar_select %p259, %s20, 2
      %p261 = scmp.lt.s32.totalorder %s258, 1
      %s262 = scalar_select %p261, %s258, 1
      %p263 = scmp.lt.s32.totalorder %s22, 0
      %s264 = scalar_select %p263, %s22, 0
      %s265 = sadd.s32 %s264, %s262
      %s266 = smul.addr %s260, 2
      %s267 = sadd.s32 %s265, %s266
      %s268 = smul.addr %s267, 4
      %s269 = scalar_lea.vmem %s3, %s268
      %s270 = smul.u32 2, %s21
      %p271 = scmp.lt.s32.totalorder %s20, 2
      %s272 = scalar_select %p271, %s20, 2
      %p273 = scmp.lt.s32.totalorder %s270, 1
      %s274 = scalar_select %p273, %s270, 1
      %p275 = scmp.lt.s32.totalorder %s23, 0
      %s276 = scalar_select %p275, %s23, 0
      %s277 = sadd.s32 %s276, %s274
      %s278 = smul.addr %s272, 2
      %s279 = sadd.s32 %s277, %s278
      %s280 = smul.addr %s279, 4
      %s281 = scalar_lea.vmem %s0, %s280
      %s282 = smul.u32 2, %s21
      %s283 = smul.u32 4, %s23
      %p284 = scmp.lt.s32.totalorder %s20, 2
      %s285 = scalar_select %p284, %s20, 2
      %p286 = scmp.lt.s32.totalorder %s283, 3
      %s287 = scalar_select %p286, %s283, 3
      %p288 = scmp.lt.s32.totalorder %s22, 0
      %s289 = scalar_select %p288, %s22, 0
      %s290 = sadd.s32 %s289, %s287
      %s291 = smul.addr %s285, 4
      %s292 = sadd.s32 %s290, %s291
      %s293 = smul.addr %s292, 4
      %s294 = scalar_lea.vmem %s1, %s293
      %s295 = smul.u32 4, %s23
      %p296 = scmp.lt.s32.totalorder %s20, 2
      %s297 = scalar_select %p296, %s20, 2
      %p298 = scmp.lt.s32.totalorder %s22, 0
      %s299 = scalar_select %p298, %s22, 0
      %s300 = sadd.s32 %s299, %s297
      %s301 = scalar_lea.vmem %s2, %s300
      %s302 = smul.u32 2, %s21
      %p303 = scmp.lt.s32.totalorder %s20, 2
      %s304 = scalar_select %p303, %s20, 2
      %p305 = scmp.lt.s32.totalorder %s302, 1
      %s306 = scalar_select %p305, %s302, 1
      %p307 = scmp.lt.s32.totalorder %s22, 0
      %s308 = scalar_select %p307, %s22, 0
      %s309 = sadd.s32 %s308, %s306
      %s310 = smul.addr %s304, 2
      %s311 = sadd.s32 %s309, %s310
      %s312 = smul.addr %s311, 4
      %s313 = scalar_lea.vmem %s3, %s312
      %s314 = smul.u32 2, %s21
      %p316 = scmp.eq.s32.totalorder %s23, 0
      // Predicated region
      $region33: #{a_call__.3} parent=31 // pred_check
        %p317 = pneg %p316
      $region34: #{a_call__.3} parent=31 // pred_check_branch
        %319 = sbr.rel (%p317) target = $region36
      $region35: #{a_call__.3} parent=31 // pred_region
        %vm320 = vcmask 261120
        %321 = vst.msk [vmem:[#allocation2] sm:$0xff] %vm320, 0.0
        %322 = vst.msk [vmem:[#allocation2 + $0x8] sm:$0xff] %vm320, 0.0
      $region36: #{a_call__.3} parent=31 // pred_fallthru
        _
      %v323 = vld [vmem:[#allocation2] sm:$0xff]
      %v324 = vld [vmem:[#allocation2 + $0x8] sm:$0xff]
      %v325 = vld [vmem:[%s281] sm:$0xf]
      %v326 = vld [vmem:[%s281 + $0x4] sm:$0xf]
      %v327 = vld [vmem:[%s294] sm:$0xf]
      %v328 = vld [vmem:[%s294 + $0x4] sm:$0xf]
      %v329 = vld [vmem:[%s294 + $0x8] sm:$0xf]
      %v330 = vld [vmem:[%s294 + $0xc] sm:$0xf]
      %v333 = vunpack.c.l.b16 %v325
      %v334 = vunpack.c.l.b16 %v326
      %v335 = vpack.c.b16 %v334, %v333
      %v340 = vunpack.c.l.b16 %v327
      %v341 = vunpack.c.l.b16 %v328
      %v342 = vunpack.c.l.b16 %v329
      %v343 = vunpack.c.l.b16 %v330
      %v344 = vpack.c.b16 %v341, %v340
      %v345 = vpack.c.b16 %v343, %v342
      %vm348 = vcmask 261120
      %v350 = vsel %vm348, %v335, 0
      %352 = vmatprep.subr.bf16.mxu0 0
      %353 = vmatpush1.bf16.msra.mxu0 0
      %354 = vmatprep.subr.bf16.mxu0 0
      %355 = vmatpush1.bf16.msra.mxu0 0
      %356 = vmatprep.subr.bf16.mxu0 0
      %357 = vmatpush1.bf16.msra.mxu0 0
      %358 = vmatprep.subr.bf16.mxu0 0
      %359 = vmatpush1.bf16.msra.mxu0 0
      %360 = vmatprep.subr.bf16.mxu0 0
      %361 = vmatpush1.bf16.msra.mxu0 0
      %362 = vmatprep.subr.bf16.mxu0 0
      %363 = vmatpush1.bf16.msra.mxu0 0
      %364 = vmatprep.subr.bf16.mxu0 0
      %365 = vmatpush1.bf16.msra.mxu0 %v345
      %366 = vmatprep.subr.bf16.mxu0 0
      %367 = vmatpush1.bf16.msra.mxu0 %v344
      %368 = vmatprep.subr.bf16.mxu0 0
      %369 = vmatpush2.bf16.msra.mxu0 0
      %370 = vmatprep.subr.bf16.mxu0 0
      %371 = vmatpush2.bf16.msra.mxu0 0
      %372 = vmatprep.subr.bf16.mxu0 0
      %373 = vmatpush2.bf16.msra.mxu0 0
      %374 = vmatprep.subr.bf16.mxu0 0
      %375 = vmatpush2.bf16.msra.mxu0 0
      %376 = vmatprep.subr.bf16.mxu0 0
      %377 = vmatpush2.bf16.msra.mxu0 0
      %378 = vmatprep.subr.bf16.mxu0 0
      %379 = vmatpush2.bf16.msra.mxu0 0
      %380 = vmatprep.subr.bf16.mxu0 0
      %381 = vmatpush2.bf16.msra.mxu0 0
      %382 = vmatprep.subr.bf16.mxu0 0
      %383 = vmatpush2.bf16.msra.mxu0 0
      %384 = vmatprep.mubr.bf16.mxu0 0
      %385 = vmatmul.mubr.bf16.gmra.mxu0 %v350
      %v386 = vpop.f32.mrf.mxu0
      %v387 = vadd.f32 0.0, %v386
      %v388 = vpop.f32.mrf.mxu0
      %v389 = vpop.f32.mrf.mxu0
      %v390 = vadd.f32 0.0, %v389
      %v391 = vpop.f32.mrf.mxu0
      %392 = vdwg.mxu0
      %v393 = vadd.f32 %v323, %v387
      %v394 = vadd.f32 %v324, %v390
      %395 = vst.msk [vmem:[#allocation2] sm:$0xff] %vm348, %v393
      %396 = vst.msk [vmem:[#allocation2 + $0x8] sm:$0xff] %vm348, %v394
      // Predicated region
      $region37: #{a_call__.3} parent=31 // pred_check
        %p397 = pneg %p316
      $region38: #{a_call__.3} parent=31 // pred_check_branch
        %399 = sbr.rel (%p397) target = $region40
      $region39: #{a_call__.3} parent=31 // pred_region
        %v400 = vld [vmem:[#allocation2] sm:$0xff]
        %v401 = vld [vmem:[#allocation2 + $0x8] sm:$0xff]
        %v402 = vld [vmem:[%s301] sm:$0x1]
        %v404 = vlaneseq
        %v405 = vshrl.u32 %v404, 7
        %v406 = vsub.s32 0, %v405
        %v407 = vrot.slane %v402, %v406
        %v409 = vadd.f32 %v400, %v407
        %v410 = vadd.f32 %v401, %v407
        %v411 = vpack.c.bf16 %v410, %v409
        %v413 = vunpack.c.l.b16 %v411
        %v414 = vunpack.c.h.b16 %v411
        %v415 = vpack.c.b16 %v413, %v413
        %v416 = vpack.c.b16 %v414, %v414
        %vm419 = vcmask 257024
        %420 = vst.msk [vmem:[%s313] sm:$0xf] %vm419, %v415
        %421 = vst.msk [vmem:[%s313 + $0x4] sm:$0xf] %vm419, %v416
      $region40: #{a_call__.3} parent=31 // pred_fallthru
        _
      %s422 = smul.u32 2, %s21
      %p423 = scmp.lt.s32.totalorder %s20, 2
      %s424 = scalar_select %p423, %s20, 2
      %p425 = scmp.lt.s32.totalorder %s422, 1
      %s426 = scalar_select %p425, %s422, 1
      %p427 = scmp.lt.s32.totalorder %s22, 0
      %s428 = scalar_select %p427, %s22, 0
      %s429 = sadd.s32 %s428, %s426
      %s430 = smul.addr %s424, 2
      %s431 = sadd.s32 %s429, %s430
      %s432 = smul.addr %s431, 4
      %s433 = scalar_lea.vmem %s3, %s432
      // Predicated region
      $region41: #{a_call__.3} parent=31 // pred_check
        %p434 = pneg %p150
      $region42: #{a_call__.3} parent=31 // pred_check_branch
        %436 = sbr.rel (%p434) target = $region44
      $region43: #{a_call__.3} parent=31 // pred_region
        %s437 = smul.u32 2, %s21
      $region44: #{a_call__.3} parent=31 // pred_fallthru
        _
    $region32: #{a_call__.3} parent=5 // pred_fallthru
      _
    %p438 = scmp.le.s32.totalorder 2, %s9
    // Predicated region
    $region45: #{a_call__.3} parent=5 // pred_check
      %p439 = pneg %p438
    $region46: #{a_call__.3} parent=5 // pred_check_branch
      %441 = sbr.rel (%p439) target = $region48
    $region47: #{a_call__.3} parent=5 // pred_region
      %s442 = ssub.s32 %s9, 2
      // Predicated region
      $region49: #{a_call__.3} parent=47 // pred_check
        %p443 = pneg %p156
      $region50: #{a_call__.3} parent=47 // pred_check_branch
        %445 = sbr.rel (%p443) target = $region52
      $region51: #{a_call__.3} parent=47 // pred_region
        %s446 = smul.u32 2, %s25
        %p447 = scmp.lt.s32.totalorder %s24, 2
        %s448 = scalar_select %p447, %s24, 2
        %p449 = scmp.lt.s32.totalorder %s446, 1
        %s450 = scalar_select %p449, %s446, 1
        %p451 = scmp.lt.s32.totalorder %s26, 0
        %s452 = scalar_select %p451, %s26, 0
        %s453 = sadd.s32 %s452, %s450
        %s454 = smul.addr %s448, 2
        %s455 = sadd.s32 %s453, %s454
        %s456 = smul.addr %s455, 4
        %s457 = scalar_lea.vmem %s3, %s456
      $region52: #{a_call__.3} parent=47 // pred_fallthru
        _
    $region48: #{a_call__.3} parent=5 // pred_fallthru
      _
  $region6: #{a_call__.3} parent=0 // loop_footer
    %s13 = sadd.s32 1, %s9
  $region7: #{a_call__.3} parent=0 // loop_footer_branch
    %8 = sbr.rel target = $region3
  $region8: #{a_call__.3} parent=0 // loop_exit
    _

// kernel: a_call__.4
$region0: #{a_call__.4}
  #allocation0 [shape = 'u32[]', space=smem, size = 0x4, offset = 0x4, fixed_abs, tag = 'smem constant byte address 0x4 - core index']
  #allocation1 [shape = 'u32[144,128]{1,0:T(1,128)}', space=vmem, size = 0x12000, scoped, tag = 'internal scratch']
  %s0 = inlined_call_operand.vmem [shape: bf16[2,4,8,8], index: 0, kind: input, shape index: {}]
  %s1 = inlined_call_operand.vmem [shape: bf16[2,4,8,8], index: 1, kind: input, shape index: {}]
  %s2 = inlined_call_operand.vmem [shape: bf16[2,4,8,8], index: 2, kind: input, shape index: {}]
  %s3 = inlined_call_operand.vmem [shape: bf16[2,8,32], index: 3, kind: output, shape index: {0}]
  %s4 = inlined_call_operand.hbm [shape: f32[2,8,8], index: 4, kind: output, shape index: {1}]
  %5 = xla_tuple %s3, %s4
  %s6 = sld [smem:[#allocation0]]
  $region61: #{a_call__.4} parent=0
    _
  %s8 = ssub.s32 1, %s6
  %s9 = scalar_select 0, %s8, %s6
  $region1: #{a_call__.4} parent=0
    #allocation2 [shape = 'u8[8192]{0}', space=vmem, size = 0x2000, scoped, tag = 'output window, operand 1']
    #allocation3 [shape = 's32[2]{0}', space=sflag, size = 0x8, scoped, tag = 'scoped memory for a_call__.4']
    %10 = vsyncpa [#allocation3], 0
    %s11 = scalar_lea.sflag [#allocation3], 1
    %12 = vsyncpa %s11, 0
    loop: start=0, step=1, limit=4
    $region2: #{a_call__.4} parent=1 // loop_pre_header
      _
    $region3: #{a_call__.4} parent=1 // loop_header
      %s14 = sphi 0, %s18
      %p15 = scmp.ge.s32.totalorder %s14, 4
      %s21 = sphi 0, %s40
      %s22 = sphi 0, %s36
      %s23 = sphi 0, %s32
      %s24 = sphi 0, %s21
      %s25 = sphi 0, %s22
      %s26 = sphi 0, %s23
      %s27 = sphi 0, %s24
      %s28 = sphi 0, %s25
      %s29 = sphi 0, %s26
      %s47 = sphi 0, %s49
      %s50 = sphi 0, %s47
      %s51 = sphi 0, %s50
      %s67 = sphi 0, %s51
      %s75 = sphi 0, %s77
      %s78 = sphi 0, %s75
      %s79 = sphi 0, %s78
      %s95 = sphi 0, %s79
      %s103 = sphi 0, %s105
      %s106 = sphi 0, %s103
      %s107 = sphi 0, %s106
      %s123 = sphi 0, %s107
      %s133 = sphi 0, %s135
      %s136 = sphi 0, %s133
      %s137 = sphi 0, %s136
      %s153 = sphi 0, %s137
      %s161 = sphi 0, %s163
      %s164 = sphi 0, %s161
      %s165 = sphi 0, %s164
      %s181 = sphi 0, %s165
    $region4: #{a_call__.4} parent=1 // loop_header_branch
      %17 = sbr.rel (%p15) target = $region8
    $region5: #{a_call__.4} parent=1 // loop_body
      %s19 = ssub.s32 %s14, 1
      %s20 = ssub.s32 %s14, 2
      %s30 = sadd.s32 1, %s23
      %p31 = scmp.ge.s32.totalorder %s30, 1
      %s32 = scalar_select %p31, 0, %s30
      %s33 = sadd.s32 1, %s22
      %s34 = scalar_select %p31, %s33, %s22
      %p35 = scmp.ge.s32.totalorder %s34, 1
      %s36 = scalar_select %p35, 0, %s34
      %s37 = sadd.s32 1, %s21
      %s38 = scalar_select %p35, %s37, %s21
      %p39 = scmp.ge.s32.totalorder %s38, 2
      %s40 = scalar_select %p39, 0, %s38
      %s41 = ssub.s32 %s21, %s40
      %s42 = ssub.s32 %s23, %s32
      %s43 = sor.u32 %s41, %s42
      %s44 = ssub.s32 %s22, %s36
      %s45 = sor.u32 %s43, %s44
      %p46 = scmp.eq.s32.totalorder %s45, 0
      %s48 = sadd.s32 %s47, 1
      %s49 = scalar_select %p46, %s47, %s48
      %p52 = pneg %p46
      %p53 = scmp.eq.s32.totalorder %s14, 1
      %p54 = por %p52, %p53
      %p55 = scmp.ne.s32.totalorder %s47, %s50
      %p56 = scmp.eq.s32.totalorder %s14, 0
      %p57 = por %p55, %p56
      %p58 = scmp.ne.s32.totalorder %s47, %s50
      %p59 = scmp.eq.s32.totalorder %s19, 1
      %p60 = por %p58, %p59
      %p61 = scmp.ne.s32.totalorder %s50, %s51
      %p62 = scmp.eq.s32.totalorder %s19, 0
      %p63 = por %p61, %p62
      %p64 = scmp.ne.s32.totalorder %s50, %s51
      %p65 = scmp.eq.s32.totalorder %s20, 1
      %p66 = por %p64, %p65
      %p68 = scmp.ne.s32.totalorder %s51, %s67
      %p69 = scmp.eq.s32.totalorder %s20, 0
      %p70 = por %p68, %p69
      %s71 = ssub.s32 %s21, %s40
      %s72 = ssub.s32 %s23, %s32
      %s73 = sor.u32 %s71, %s72
      %p74 = scmp.eq.s32.totalorder %s73, 0
      %s76 = sadd.s32 %s75, 1
      %s77 = scalar_select %p74, %s75, %s76
      %p80 = pneg %p74
      %p81 = scmp.eq.s32.totalorder %s14, 1
      %p82 = por %p80, %p81
      %p83 = scmp.ne.s32.totalorder %s75, %s78
      %p84 = scmp.eq.s32.totalorder %s14, 0
      %p85 = por %p83, %p84
      %p86 = scmp.ne.s32.totalorder %s75, %s78
      %p87 = scmp.eq.s32.totalorder %s19, 1
      %p88 = por %p86, %p87
      %p89 = scmp.ne.s32.totalorder %s78, %s79
      %p90 = scmp.eq.s32.totalorder %s19, 0
      %p91 = por %p89, %p90
      %p92 = scmp.ne.s32.totalorder %s78, %s79
      %p93 = scmp.eq.s32.totalorder %s20, 1
      %p94 = por %p92, %p93
      %p96 = scmp.ne.s32.totalorder %s79, %s95
      %p97 = scmp.eq.s32.totalorder %s20, 0
      %p98 = por %p96, %p97
      %s99 = ssub.s32 %s21, %s40
      %s100 = ssub.s32 %s23, %s32
      %s101 = sor.u32 %s99, %s100
      %p102 = scmp.eq.s32.totalorder %s101, 0
      %s104 = sadd.s32 %s103, 1
      %s105 = scalar_select %p102, %s103, %s104
      %p108 = pneg %p102
      %p109 = scmp.eq.s32.totalorder %s14, 1
      %p110 = por %p108, %p109
      %p111 = scmp.ne.s32.totalorder %s103, %s106
      %p112 = scmp.eq.s32.totalorder %s14, 0
      %p113 = por %p111, %p112
      %p114 = scmp.ne.s32.totalorder %s103, %s106
      %p115 = scmp.eq.s32.totalorder %s19, 1
      %p116 = por %p114, %p115
      %p117 = scmp.ne.s32.totalorder %s106, %s107
      %p118 = scmp.eq.s32.totalorder %s19, 0
      %p119 = por %p117, %p118
      %p120 = scmp.ne.s32.totalorder %s106, %s107
      %p121 = scmp.eq.s32.totalorder %s20, 1
      %p122 = por %p120, %p121
      %p124 = scmp.ne.s32.totalorder %s107, %s123
      %p125 = scmp.eq.s32.totalorder %s20, 0
      %p126 = por %p124, %p125
      %s127 = ssub.s32 %s21, %s40
      %s128 = ssub.s32 %s22, %s36
      %s129 = sor.u32 %s127, %s128
      %s130 = ssub.s32 %s23, %s32
      %s131 = sor.u32 %s129, %s130
      %p132 = scmp.eq.s32.totalorder %s131, 0
      %s134 = sadd.s32 %s133, 1
      %s135 = scalar_select %p132, %s133, %s134
      %p138 = pneg %p132
      %p139 = scmp.eq.s32.totalorder %s14, 1
      %p140 = por %p138, %p139
      %p141 = scmp.ne.s32.totalorder %s133, %s136
      %p142 = scmp.eq.s32.totalorder %s14, 0
      %p143 = por %p141, %p142
      %p144 = scmp.ne.s32.totalorder %s133, %s136
      %p145 = scmp.eq.s32.totalorder %s19, 1
      %p146 = por %p144, %p145
      %p147 = scmp.ne.s32.totalorder %s136, %s137
      %p148 = scmp.eq.s32.totalorder %s19, 0
      %p149 = por %p147, %p148
      %p150 = scmp.ne.s32.totalorder %s136, %s137
      %p151 = scmp.eq.s32.totalorder %s20, 1
      %p152 = por %p150, %p151
      %p154 = scmp.ne.s32.totalorder %s137, %s153
      %p155 = scmp.eq.s32.totalorder %s20, 0
      %p156 = por %p154, %p155
      %s157 = ssub.s32 %s21, %s40
      %s158 = ssub.s32 %s22, %s36
      %s159 = sor.u32 %s157, %s158
      %p160 = scmp.eq.s32.totalorder %s159, 0
      %s162 = sadd.s32 %s161, 1
      %s163 = scalar_select %p160, %s161, %s162
      %p166 = pneg %p160
      %p167 = scmp.eq.s32.totalorder %s14, 1
      %p168 = por %p166, %p167
      %p169 = scmp.ne.s32.totalorder %s161, %s164
      %p170 = scmp.eq.s32.totalorder %s14, 0
      %p171 = por %p169, %p170
      %p172 = scmp.ne.s32.totalorder %s161, %s164
      %p173 = scmp.eq.s32.totalorder %s19, 1
      %p174 = por %p172, %p173
      %p175 = scmp.ne.s32.totalorder %s164, %s165
      %p176 = scmp.eq.s32.totalorder %s19, 0
      %p177 = por %p175, %p176
      %p178 = scmp.ne.s32.totalorder %s164, %s165
      %p179 = scmp.eq.s32.totalorder %s20, 1
      %p180 = por %p178, %p179
      %p182 = scmp.ne.s32.totalorder %s165, %s181
      %p183 = scmp.eq.s32.totalorder %s20, 0
      %p184 = por %p182, %p183
      %p185 = scmp.le.s32.totalorder 1, %s14
      %p186 = scmp.lt.s32.totalorder %s14, 3
      %p187 = pnand %p185, %p186
      %p188 = pneg %p187
      // Predicated region
      $region9: #{a_call__.4} parent=5 // pred_check
        _
      $region10: #{a_call__.4} parent=5 // pred_check_branch
        %190 = sbr.rel (%p187) target = $region12
      $region11: #{a_call__.4} parent=5 // pred_region
        %s191 = ssub.s32 %s14, 1
      $region12: #{a_call__.4} parent=5 // pred_fallthru
        _
      %p192 = scmp.lt.s32.totalorder %s14, 2
      // Predicated region
      $region13: #{a_call__.4} parent=5 // pred_check
        %p193 = pneg %p192
      $region14: #{a_call__.4} parent=5 // pred_check_branch
        %195 = sbr.rel (%p193) target = $region16
      $region15: #{a_call__.4} parent=5 // pred_region
        // Predicated region
        $region17: #{a_call__.4} parent=15 // pred_check
          %p196 = pneg %p57
        $region18: #{a_call__.4} parent=15 // pred_check_branch
          %198 = sbr.rel (%p196) target = $region20
        $region19: #{a_call__.4} parent=15 // pred_region
          %s199 = smul.u32 4, %s23
          %p200 = scmp.lt.s32.totalorder %s21, 1
          %s201 = scalar_select %p200, %s21, 1
          %p202 = scmp.lt.s32.totalorder %s199, 3
          %s203 = scalar_select %p202, %s199, 3
          %p204 = scmp.lt.s32.totalorder %s22, 0
          %s205 = scalar_select %p204, %s22, 0
          %s206 = sadd.s32 %s205, %s203
          %s207 = smul.addr %s201, 4
          %s208 = sadd.s32 %s206, %s207
          %s209 = smul.addr %s208, 4
          %s210 = scalar_lea.vmem %s0, %s209
          %s211 = smul.u32 4, %s23
        $region20: #{a_call__.4} parent=15 // pred_fallthru
          _
        // Predicated region
        $region21: #{a_call__.4} parent=15 // pred_check
          %p212 = pneg %p85
        $region22: #{a_call__.4} parent=15 // pred_check_branch
          %214 = sbr.rel (%p212) target = $region24
        $region23: #{a_call__.4} parent=15 // pred_region
          %s215 = smul.u32 4, %s23
          %p216 = scmp.lt.s32.totalorder %s21, 1
          %s217 = scalar_select %p216, %s21, 1
          %p218 = scmp.lt.s32.totalorder %s215, 3
          %s219 = scalar_select %p218, %s215, 3
          %s220 = smul.addr %s217, 4
          %s221 = sadd.s32 %s219, %s220
          %s222 = smul.addr %s221, 4
          %s223 = scalar_lea.vmem %s1, %s222
          %s224 = smul.u32 4, %s23
        $region24: #{a_call__.4} parent=15 // pred_fallthru
          _
        // Predicated region
        $region25: #{a_call__.4} parent=15 // pred_check
          %p225 = pneg %p113
        $region26: #{a_call__.4} parent=15 // pred_check_branch
          %227 = sbr.rel (%p225) target = $region28
        $region27: #{a_call__.4} parent=15 // pred_region
          %s228 = smul.u32 4, %s23
          %p229 = scmp.lt.s32.totalorder %s21, 1
          %s230 = scalar_select %p229, %s21, 1
          %p231 = scmp.lt.s32.totalorder %s228, 3
          %s232 = scalar_select %p231, %s228, 3
          %s233 = smul.addr %s230, 4
          %s234 = sadd.s32 %s232, %s233
          %s235 = smul.addr %s234, 4
          %s236 = scalar_lea.vmem %s2, %s235
          %s237 = smul.u32 4, %s23
        $region28: #{a_call__.4} parent=15 // pred_fallthru
          _
      $region16: #{a_call__.4} parent=5 // pred_fallthru
        _
      %p238 = scmp.le.s32.totalorder 1, %s14
      %p239 = scmp.lt.s32.totalorder %s14, 3
      %p240 = pnand %p238, %p239
      %p241 = pneg %p240
      // Predicated region
      $region29: #{a_call__.4} parent=5 // pred_check
        _
      $region30: #{a_call__.4} parent=5 // pred_check_branch
        %243 = sbr.rel (%p240) target = $region32
      $region31: #{a_call__.4} parent=5 // pred_region
        %s244 = ssub.s32 %s14, 1
        %s245 = smul.u32 4, %s26
        %p246 = scmp.lt.s32.totalorder %s24, 1
        %s247 = scalar_select %p246, %s24, 1
        %p248 = scmp.lt.s32.totalorder %s245, 3
        %s249 = scalar_select %p248, %s245, 3
        %p250 = scmp.lt.s32.totalorder %s25, 0
        %s251 = scalar_select %p250, %s25, 0
        %s252 = sadd.s32 %s251, %s249
        %s253 = smul.addr %s247, 4
        %s254 = sadd.s32 %s252, %s253
        %s255 = smul.addr %s254, 4
        %s256 = scalar_lea.vmem %s0, %s255
        %p257 = pneg %p63
        %p258 = pneg %p60
        %s259 = smul.u32 4, %s26
        %p260 = scmp.lt.s32.totalorder %s24, 1
        %s261 = scalar_select %p260, %s24, 1
        %p262 = scmp.lt.s32.totalorder %s259, 3
        %s263 = scalar_select %p262, %s259, 3
        %s264 = smul.addr %s261, 4
        %s265 = sadd.s32 %s263, %s264
        %s266 = smul.addr %s265, 4
        %s267 = scalar_lea.vmem %s1, %s266
        %p268 = pneg %p91
        %p269 = pneg %p88
        %s270 = smul.u32 4, %s26
        %p271 = scmp.lt.s32.totalorder %s24, 1
        %s272 = scalar_select %p271, %s24, 1
        %p273 = scmp.lt.s32.totalorder %s270, 3
        %s274 = scalar_select %p273, %s270, 3
        %s275 = smul.addr %s272, 4
        %s276 = sadd.s32 %s274, %s275
        %s277 = smul.addr %s276, 4
        %s278 = scalar_lea.vmem %s2, %s277
        %p279 = pneg %p119
        %p280 = pneg %p116
        %p281 = pneg %p149
        %p282 = pneg %p146
        %p283 = scmp.lt.s32.totalorder %s24, 1
        %s284 = scalar_select %p283, %s24, 1
        %p285 = scmp.lt.s32.totalorder %s25, 0
        %s286 = scalar_select %p285, %s25, 0
        %p287 = scmp.lt.s32.totalorder %s26, 0
        %s288 = scalar_select %p287, %s26, 0
        %s289 = sadd.s32 %s288, %s286
        %s290 = sadd.s32 %s289, %s284
        %s291 = smul.addr %s290, 4
        %s292 = scalar_lea.vmem %s3, %s291
        %p293 = pneg %p177
        %p294 = pneg %p174
        %s295 = sand.u32 %s164, 1
        %s296 = scalar_lea.sflag [#allocation3], %s295
        %s297 = sand.u32 %s164, 1
        %s298 = smul.addr %s297, 8
        %s299 = scalar_lea.vmem [#allocation2], %s298
        %s300 = smul.u32 4, %s26
        %p301 = scmp.lt.s32.totalorder %s24, 1
        %s302 = scalar_select %p301, %s24, 1
        %p303 = scmp.lt.s32.totalorder %s300, 3
        %s304 = scalar_select %p303, %s300, 3
        %p305 = scmp.lt.s32.totalorder %s25, 0
        %s306 = scalar_select %p305, %s25, 0
        %s307 = sadd.s32 %s306, %s304
        %s308 = smul.addr %s302, 4
        %s309 = sadd.s32 %s307, %s308
        %s310 = smul.addr %s309, 4
        %s311 = scalar_lea.vmem %s0, %s310
        %s312 = smul.u32 4, %s26
        %s313 = smul.u32 4, %s26
        %p314 = scmp.lt.s32.totalorder %s24, 1
        %s315 = scalar_select %p314, %s24, 1
        %p316 = scmp.lt.s32.totalorder %s313, 3
        %s317 = scalar_select %p316, %s313, 3
        %s318 = smul.addr %s315, 4
        %s319 = sadd.s32 %s317, %s318
        %s320 = smul.addr %s319, 4
        %s321 = scalar_lea.vmem %s1, %s320
        %s322 = smul.u32 4, %s26
        %s323 = smul.u32 4, %s26
        %p324 = scmp.lt.s32.totalorder %s24, 1
        %s325 = scalar_select %p324, %s24, 1
        %p326 = scmp.lt.s32.totalorder %s323, 3
        %s327 = scalar_select %p326, %s323, 3
        %s328 = smul.addr %s325, 4
        %s329 = sadd.s32 %s327, %s328
        %s330 = smul.addr %s329, 4
        %s331 = scalar_lea.vmem %s2, %s330
        %s332 = smul.u32 4, %s26
        %p333 = scmp.lt.s32.totalorder %s24, 1
        %s334 = scalar_select %p333, %s24, 1
        %p335 = scmp.lt.s32.totalorder %s25, 0
        %s336 = scalar_select %p335, %s25, 0
        %p337 = scmp.lt.s32.totalorder %s26, 0
        %s338 = scalar_select %p337, %s26, 0
        %s339 = sadd.s32 %s338, %s336
        %s340 = sadd.s32 %s339, %s334
        %s341 = smul.addr %s340, 4
        %s342 = scalar_lea.vmem %s3, %s341
        %v344 = vld [vmem:[%s311] sm:$0xf]
        %v345 = vld [vmem:[%s321] sm:$0xf]
        %v346 = vld [vmem:[%s331] sm:$0xf]
        %vm347 = vcmask 64512
        %v349 = vsel %vm347, %v344, 0
        %v352 = vsel %vm347, %v345, 0
        %354 = vmatprep.subr.bf16.mxu0 0
        %355 = vmatpush1.bf16.xpose.msra.mxu0 0
        %356 = vmatprep.subr.bf16.mxu0 0
        %357 = vmatpush1.bf16.xpose.msra.mxu0 0
        %358 = vmatprep.subr.bf16.mxu0 0
        %359 = vmatpush1.bf16.xpose.msra.mxu0 0
        %360 = vmatprep.subr.bf16.mxu0 0
        %361 = vmatpush1.bf16.xpose.msra.mxu0 0
        %362 = vmatprep.subr.bf16.mxu0 0
        %363 = vmatpush1.bf16.xpose.msra.mxu0 0
        %364 = vmatprep.subr.bf16.mxu0 0
        %365 = vmatpush1.bf16.xpose.msra.mxu0 0
        %366 = vmatprep.subr.bf16.mxu0 0
        %367 = vmatpush1.bf16.xpose.msra.mxu0 0
        %368 = vmatprep.subr.bf16.mxu0 0
        %369 = vmatpush1.bf16.xpose.msra.mxu0 %v352
        %370 = vmatprep.subr.bf16.mxu0 0
        %371 = vmatpush2.bf16.xpose.msra.mxu0 0
        %372 = vmatprep.subr.bf16.mxu0 0
        %373 = vmatpush2.bf16.xpose.msra.mxu0 0
        %374 = vmatprep.subr.bf16.mxu0 0
        %375 = vmatpush2.bf16.xpose.msra.mxu0 0
        %376 = vmatprep.subr.bf16.mxu0 0
        %377 = vmatpush2.bf16.xpose.msra.mxu0 0
        %378 = vmatprep.subr.bf16.mxu0 0
        %379 = vmatpush2.bf16.xpose.msra.mxu0 0
        %380 = vmatprep.subr.bf16.mxu0 0
        %381 = vmatpush2.bf16.xpose.msra.mxu0 0
        %382 = vmatprep.subr.bf16.mxu0 0
        %383 = vmatpush2.bf16.xpose.msra.mxu0 0
        %384 = vmatprep.subr.bf16.mxu0 0
        %385 = vmatpush2.bf16.xpose.msra.mxu0 0
        %386 = vmatprep.mubr.bf16.mxu0 0
        %387 = vmatmul.mubr.bf16.gmra.mxu0 %v349
        %v388 = vpop.f32.mrf.mxu0
        %v389 = vadd.f32 0.0, %v388
        %v390 = vpop.f32.mrf.mxu0
        %v391 = vpop.f32.mrf.mxu0
        %v392 = vpop.f32.mrf.mxu0
        %393 = vdwg.mxu0
        %v394 = vsel %vm347, %v389, -inf
        %395 = vmax.xlane.f32.xlu0 %v394
        %v396 = vpop.xlane.xlu0 %395
        %v397 = vsub.f32 %v389, %v396
        %v398 = vmul.f32 %v397, 1.442695
        %v399 = vpow.pop %v398
        %v400 = vsel %vm347, %v399, 0.0
        %401 = vadd.xlane.f32.xlu0 %v400
        %v402 = vpop.xlane.xlu0 %401
        %v403 = vrcp.pop %v402
        %v404 = vmul.f32 %v399, %v403
        %v405 = vpack.c.bf16 %v404, %v404
        %v407 = vsel %vm347, %v405, 0
        %vm409 = vcmask 1043456
        %v411 = vsel %vm409, %v346, 0
        %413 = vmatprep.subr.bf16.mxu0 0
        %414 = vmatpush1.bf16.msra.mxu0 0
        %415 = vmatprep.subr.bf16.mxu0 0
        %416 = vmatpush1.bf16.msra.mxu0 0
        %417 = vmatprep.subr.bf16.mxu0 0
        %418 = vmatpush1.bf16.msra.mxu0 0
        %419 = vmatprep.subr.bf16.mxu0 0
        %420 = vmatpush1.bf16.msra.mxu0 0
        %421 = vmatprep.subr.bf16.mxu0 0
        %422 = vmatpush1.bf16.msra.mxu0 0
        %423 = vmatprep.subr.bf16.mxu0 0
        %424 = vmatpush1.bf16.msra.mxu0 0
        %425 = vmatprep.subr.bf16.mxu0 0
        %426 = vmatpush1.bf16.msra.mxu0 0
        %427 = vmatprep.subr.bf16.mxu0 0
        %428 = vmatpush1.bf16.msra.mxu0 %v411
        %429 = vmatprep.subr.bf16.mxu0 0
        %430 = vmatpush2.bf16.msra.mxu0 0
        %431 = vmatprep.subr.bf16.mxu0 0
        %432 = vmatpush2.bf16.msra.mxu0 0
        %433 = vmatprep.subr.bf16.mxu0 0
        %434 = vmatpush2.bf16.msra.mxu0 0
        %435 = vmatprep.subr.bf16.mxu0 0
        %436 = vmatpush2.bf16.msra.mxu0 0
        %437 = vmatprep.subr.bf16.mxu0 0
        %438 = vmatpush2.bf16.msra.mxu0 0
        %439 = vmatprep.subr.bf16.mxu0 0
        %440 = vmatpush2.bf16.msra.mxu0 0
        %441 = vmatprep.subr.bf16.mxu0 0
        %442 = vmatpush2.bf16.msra.mxu0 0
        %443 = vmatprep.subr.bf16.mxu0 0
        %444 = vmatpush2.bf16.msra.mxu0 0
        %445 = vmatprep.mubr.bf16.mxu0 0
        %446 = vmatmul.mubr.bf16.gmra.mxu0 %v407
        %v447 = vpop.f32.mrf.mxu0
        %v448 = vadd.f32 0.0, %v447
        %v449 = vpop.f32.mrf.mxu0
        %v450 = vpop.f32.mrf.mxu0
        %v451 = vpop.f32.mrf.mxu0
        %452 = vdwg.mxu0
        %v453 = vpack.c.bf16 %v448, %v448
        %vm454 = vcmask 60416
        %455 = vst.msk [vmem:[%s342] sm:$0xf] %vm454, %v453
        %s456 = scalar_lea.vmem %s311, 4
        %v457 = vld [vmem:[%s456] sm:$0xf]
        %s458 = scalar_lea.vmem %s321, 4
        %v459 = vld [vmem:[%s458] sm:$0xf]
        %s460 = scalar_lea.vmem %s331, 4
        %v461 = vld [vmem:[%s460] sm:$0xf]
        %v463 = vsel %vm347, %v457, 0
        %v466 = vsel %vm347, %v459, 0
        %468 = vmatprep.subr.bf16.mxu0 0
        %469 = vmatpush1.bf16.xpose.msra.mxu0 0
        %470 = vmatprep.subr.bf16.mxu0 0
        %471 = vmatpush1.bf16.xpose.msra.mxu0 0
        %472 = vmatprep.subr.bf16.mxu0 0
        %473 = vmatpush1.bf16.xpose.msra.mxu0 0
        %474 = vmatprep.subr.bf16.mxu0 0
        %475 = vmatpush1.bf16.xpose.msra.mxu0 0
        %476 = vmatprep.subr.bf16.mxu0 0
        %477 = vmatpush1.bf16.xpose.msra.mxu0 0
        %478 = vmatprep.subr.bf16.mxu0 0
        %479 = vmatpush1.bf16.xpose.msra.mxu0 0
        %480 = vmatprep.subr.bf16.mxu0 0
        %481 = vmatpush1.bf16.xpose.msra.mxu0 0
        %482 = vmatprep.subr.bf16.mxu0 0
        %483 = vmatpush1.bf16.xpose.msra.mxu0 %v466
        %484 = vmatprep.subr.bf16.mxu0 0
        %485 = vmatpush2.bf16.xpose.msra.mxu0 0
        %486 = vmatprep.subr.bf16.mxu0 0
        %487 = vmatpush2.bf16.xpose.msra.mxu0 0
        %488 = vmatprep.subr.bf16.mxu0 0
        %489 = vmatpush2.bf16.xpose.msra.mxu0 0
        %490 = vmatprep.subr.bf16.mxu0 0
        %491 = vmatpush2.bf16.xpose.msra.mxu0 0
        %492 = vmatprep.subr.bf16.mxu0 0
        %493 = vmatpush2.bf16.xpose.msra.mxu0 0
        %494 = vmatprep.subr.bf16.mxu0 0
        %495 = vmatpush2.bf16.xpose.msra.mxu0 0
        %496 = vmatprep.subr.bf16.mxu0 0
        %497 = vmatpush2.bf16.xpose.msra.mxu0 0
        %498 = vmatprep.subr.bf16.mxu0 0
        %499 = vmatpush2.bf16.xpose.msra.mxu0 0
        %500 = vmatprep.mubr.bf16.mxu0 0
        %501 = vmatmul.mubr.bf16.gmra.mxu0 %v463
        %v502 = vpop.f32.mrf.mxu0
        %v503 = vadd.f32 0.0, %v502
        %v504 = vpop.f32.mrf.mxu0
        %v505 = vpop.f32.mrf.mxu0
        %v506 = vpop.f32.mrf.mxu0
        %507 = vdwg.mxu0
        %v508 = vsel %vm347, %v503, -inf
        %509 = vmax.xlane.f32.xlu0 %v508
        %v510 = vpop.xlane.xlu0 %509
        %v511 = vsub.f32 %v503, %v510
        %v512 = vmul.f32 %v511, 1.442695
        %v513 = vpow.pop %v512
        %v514 = vsel %vm347, %v513, 0.0
        %515 = vadd.xlane.f32.xlu0 %v514
        %v516 = vpop.xlane.xlu0 %515
        %v517 = vrcp.pop %v516
        %v518 = vmul.f32 %v513, %v517
        %v519 = vpack.c.bf16 %v518, %v518
        %v521 = vsel %vm347, %v519, 0
        %v524 = vsel %vm409, %v461, 0
        %526 = vmatprep.subr.bf16.mxu0 0
        %527 = vmatpush1.bf16.msra.mxu0 0
        %528 = vmatprep.subr.bf16.mxu0 0
        %529 = vmatpush1.bf16.msra.mxu0 0
        %530 = vmatprep.subr.bf16.mxu0 0
        %531 = vmatpush1.bf16.msra.mxu0 0
        %532 = vmatprep.subr.bf16.mxu0 0
        %533 = vmatpush1.bf16.msra.mxu0 0
        %534 = vmatprep.subr.bf16.mxu0 0
        %535 = vmatpush1.bf16.msra.mxu0 0
        %536 = vmatprep.subr.bf16.mxu0 0
        %537 = vmatpush1.bf16.msra.mxu0 0
        %538 = vmatprep.subr.bf16.mxu0 0
        %539 = vmatpush1.bf16.msra.mxu0 0
        %540 = vmatprep.subr.bf16.mxu0 0
        %541 = vmatpush1.bf16.msra.mxu0 %v524
        %542 = vmatprep.subr.bf16.mxu0 0
        %543 = vmatpush2.bf16.msra.mxu0 0
        %544 = vmatprep.subr.bf16.mxu0 0
        %545 = vmatpush2.bf16.msra.mxu0 0
        %546 = vmatprep.subr.bf16.mxu0 0
        %547 = vmatpush2.bf16.msra.mxu0 0
        %548 = vmatprep.subr.bf16.mxu0 0
        %549 = vmatpush2.bf16.msra.mxu0 0
        %550 = vmatprep.subr.bf16.mxu0 0
        %551 = vmatpush2.bf16.msra.mxu0 0
        %552 = vmatprep.subr.bf16.mxu0 0
        %553 = vmatpush2.bf16.msra.mxu0 0
        %554 = vmatprep.subr.bf16.mxu0 0
        %555 = vmatpush2.bf16.msra.mxu0 0
        %556 = vmatprep.subr.bf16.mxu0 0
        %557 = vmatpush2.bf16.msra.mxu0 0
        %558 = vmatprep.mubr.bf16.mxu0 0
        %559 = vmatmul.mubr.bf16.gmra.mxu0 %v521
        %v560 = vpop.f32.mrf.mxu0
        %v561 = vadd.f32 0.0, %v560
        %v562 = vpop.f32.mrf.mxu0
        %v563 = vpop.f32.mrf.mxu0
        %v564 = vpop.f32.mrf.mxu0
        %565 = vdwg.mxu0
        %v566 = vpack.c.bf16 %v561, %v561
        %v568 = vunpack.c.l.b16 %v566
        %v569 = vpack.c.b16 %v568, %v568
        %570 = vrot.lane.b32.xlu0 %v569, 8
        %v571 = vpop.permute.xlu0 %570
        %vm573 = vcmask 126016
        %574 = vst.msk [vmem:[%s342] sm:$0xf] %vm573, %v571
        %v575 = vadd.f32 %v404, %v518
        %s576 = scalar_lea.vmem %s311, 8
        %v577 = vld [vmem:[%s576] sm:$0xf]
        %s578 = scalar_lea.vmem %s321, 8
        %v579 = vld [vmem:[%s578] sm:$0xf]
        %s580 = scalar_lea.vmem %s331, 8
        %v581 = vld [vmem:[%s580] sm:$0xf]
        %v583 = vsel %vm347, %v577, 0
        %v586 = vsel %vm347, %v579, 0
        %588 = vmatprep.subr.bf16.mxu0 0
        %589 = vmatpush1.bf16.xpose.msra.mxu0 0
        %590 = vmatprep.subr.bf16.mxu0 0
        %591 = vmatpush1.bf16.xpose.msra.mxu0 0
        %592 = vmatprep.subr.bf16.mxu0 0
        %593 = vmatpush1.bf16.xpose.msra.mxu0 0
        %594 = vmatprep.subr.bf16.mxu0 0
        %595 = vmatpush1.bf16.xpose.msra.mxu0 0
        %596 = vmatprep.subr.bf16.mxu0 0
        %597 = vmatpush1.bf16.xpose.msra.mxu0 0
        %598 = vmatprep.subr.bf16.mxu0 0
        %599 = vmatpush1.bf16.xpose.msra.mxu0 0
        %600 = vmatprep.subr.bf16.mxu0 0
        %601 = vmatpush1.bf16.xpose.msra.mxu0 0
        %602 = vmatprep.subr.bf16.mxu0 0
        %603 = vmatpush1.bf16.xpose.msra.mxu0 %v586
        %604 = vmatprep.subr.bf16.mxu0 0
        %605 = vmatpush2.bf16.xpose.msra.mxu0 0
        %606 = vmatprep.subr.bf16.mxu0 0
        %607 = vmatpush2.bf16.xpose.msra.mxu0 0
        %608 = vmatprep.subr.bf16.mxu0 0
        %609 = vmatpush2.bf16.xpose.msra.mxu0 0
        %610 = vmatprep.subr.bf16.mxu0 0
        %611 = vmatpush2.bf16.xpose.msra.mxu0 0
        %612 = vmatprep.subr.bf16.mxu0 0
        %613 = vmatpush2.bf16.xpose.msra.mxu0 0
        %614 = vmatprep.subr.bf16.mxu0 0
        %615 = vmatpush2.bf16.xpose.msra.mxu0 0
        %616 = vmatprep.subr.bf16.mxu0 0
        %617 = vmatpush2.bf16.xpose.msra.mxu0 0
        %618 = vmatprep.subr.bf16.mxu0 0
        %619 = vmatpush2.bf16.xpose.msra.mxu0 0
        %620 = vmatprep.mubr.bf16.mxu0 0
        %621 = vmatmul.mubr.bf16.gmra.mxu0 %v583
        %v622 = vpop.f32.mrf.mxu0
        %v623 = vadd.f32 0.0, %v622
        %v624 = vpop.f32.mrf.mxu0
        %v625 = vpop.f32.mrf.mxu0
        %v626 = vpop.f32.mrf.mxu0
        %627 = vdwg.mxu0
        %v628 = vsel %vm347, %v623, -inf
        %629 = vmax.xlane.f32.xlu0 %v628
        %v630 = vpop.xlane.xlu0 %629
        %v631 = vsub.f32 %v623, %v630
        %v632 = vmul.f32 %v631, 1.442695
        %v633 = vpow.pop %v632
        %v634 = vsel %vm347, %v633, 0.0
        %635 = vadd.xlane.f32.xlu0 %v634
        %v636 = vpop.xlane.xlu0 %635
        %v637 = vrcp.pop %v636
        %v638 = vmul.f32 %v633, %v637
        %v639 = vpack.c.bf16 %v638, %v638
        %v641 = vsel %vm347, %v639, 0
        %v644 = vsel %vm409, %v581, 0
        %646 = vmatprep.subr.bf16.mxu0 0
        %647 = vmatpush1.bf16.msra.mxu0 0
        %648 = vmatprep.subr.bf16.mxu0 0
        %649 = vmatpush1.bf16.msra.mxu0 0
        %650 = vmatprep.subr.bf16.mxu0 0
        %651 = vmatpush1.bf16.msra.mxu0 0
        %652 = vmatprep.subr.bf16.mxu0 0
        %653 = vmatpush1.bf16.msra.mxu0 0
        %654 = vmatprep.subr.bf16.mxu0 0
        %655 = vmatpush1.bf16.msra.mxu0 0
        %656 = vmatprep.subr.bf16.mxu0 0
        %657 = vmatpush1.bf16.msra.mxu0 0
        %658 = vmatprep.subr.bf16.mxu0 0
        %659 = vmatpush1.bf16.msra.mxu0 0
        %660 = vmatprep.subr.bf16.mxu0 0
        %661 = vmatpush1.bf16.msra.mxu0 %v644
        %662 = vmatprep.subr.bf16.mxu0 0
        %663 = vmatpush2.bf16.msra.mxu0 0
        %664 = vmatprep.subr.bf16.mxu0 0
        %665 = vmatpush2.bf16.msra.mxu0 0
        %666 = vmatprep.subr.bf16.mxu0 0
        %667 = vmatpush2.bf16.msra.mxu0 0
        %668 = vmatprep.subr.bf16.mxu0 0
        %669 = vmatpush2.bf16.msra.mxu0 0
        %670 = vmatprep.subr.bf16.mxu0 0
        %671 = vmatpush2.bf16.msra.mxu0 0
        %672 = vmatprep.subr.bf16.mxu0 0
        %673 = vmatpush2.bf16.msra.mxu0 0
        %674 = vmatprep.subr.bf16.mxu0 0
        %675 = vmatpush2.bf16.msra.mxu0 0
        %676 = vmatprep.subr.bf16.mxu0 0
        %677 = vmatpush2.bf16.msra.mxu0 0
        %678 = vmatprep.mubr.bf16.mxu0 0
        %679 = vmatmul.mubr.bf16.gmra.mxu0 %v641
        %v680 = vpop.f32.mrf.mxu0
        %v681 = vadd.f32 0.0, %v680
        %v682 = vpop.f32.mrf.mxu0
        %v683 = vpop.f32.mrf.mxu0
        %v684 = vpop.f32.mrf.mxu0
        %685 = vdwg.mxu0
        %v686 = vpack.c.bf16 %v681, %v681
        %v688 = vunpack.c.l.b16 %v686
        %v689 = vpack.c.b16 %v688, %v688
        %690 = vrot.lane.b32.xlu0 %v689, 16
        %v691 = vpop.permute.xlu0 %690
        %vm693 = vcmask 191616
        %694 = vst.msk [vmem:[%s342] sm:$0xf] %vm693, %v691
        %v695 = vadd.f32 %v575, %v638
        %s696 = scalar_lea.vmem %s311, 12
        %v697 = vld [vmem:[%s696] sm:$0xf]
        %s698 = scalar_lea.vmem %s321, 12
        %v699 = vld [vmem:[%s698] sm:$0xf]
        %s700 = scalar_lea.vmem %s331, 12
        %v701 = vld [vmem:[%s700] sm:$0xf]
        %v703 = vsel %vm347, %v697, 0
        %v706 = vsel %vm347, %v699, 0
        %708 = vmatprep.subr.bf16.mxu0 0
        %709 = vmatpush1.bf16.xpose.msra.mxu0 0
        %710 = vmatprep.subr.bf16.mxu0 0
        %711 = vmatpush1.bf16.xpose.msra.mxu0 0
        %712 = vmatprep.subr.bf16.mxu0 0
        %713 = vmatpush1.bf16.xpose.msra.mxu0 0
        %714 = vmatprep.subr.bf16.mxu0 0
        %715 = vmatpush1.bf16.xpose.msra.mxu0 0
        %716 = vmatprep.subr.bf16.mxu0 0
        %717 = vmatpush1.bf16.xpose.msra.mxu0 0
        %718 = vmatprep.subr.bf16.mxu0 0
        %719 = vmatpush1.bf16.xpose.msra.mxu0 0
        %720 = vmatprep.subr.bf16.mxu0 0
        %721 = vmatpush1.bf16.xpose.msra.mxu0 0
        %722 = vmatprep.subr.bf16.mxu0 0
        %723 = vmatpush1.bf16.xpose.msra.mxu0 %v706
        %724 = vmatprep.subr.bf16.mxu0 0
        %725 = vmatpush2.bf16.xpose.msra.mxu0 0
        %726 = vmatprep.subr.bf16.mxu0 0
        %727 = vmatpush2.bf16.xpose.msra.mxu0 0
        %728 = vmatprep.subr.bf16.mxu0 0
        %729 = vmatpush2.bf16.xpose.msra.mxu0 0
        %730 = vmatprep.subr.bf16.mxu0 0
        %731 = vmatpush2.bf16.xpose.msra.mxu0 0
        %732 = vmatprep.subr.bf16.mxu0 0
        %733 = vmatpush2.bf16.xpose.msra.mxu0 0
        %734 = vmatprep.subr.bf16.mxu0 0
        %735 = vmatpush2.bf16.xpose.msra.mxu0 0
        %736 = vmatprep.subr.bf16.mxu0 0
        %737 = vmatpush2.bf16.xpose.msra.mxu0 0
        %738 = vmatprep.subr.bf16.mxu0 0
        %739 = vmatpush2.bf16.xpose.msra.mxu0 0
        %740 = vmatprep.mubr.bf16.mxu0 0
        %741 = vmatmul.mubr.bf16.gmra.mxu0 %v703
        %v742 = vpop.f32.mrf.mxu0
        %v743 = vadd.f32 0.0, %v742
        %v744 = vpop.f32.mrf.mxu0
        %v745 = vpop.f32.mrf.mxu0
        %v746 = vpop.f32.mrf.mxu0
        %747 = vdwg.mxu0
        %v748 = vsel %vm347, %v743, -inf
        %749 = vmax.xlane.f32.xlu0 %v748
        %v750 = vpop.xlane.xlu0 %749
        %v751 = vsub.f32 %v743, %v750
        %v752 = vmul.f32 %v751, 1.442695
        %v753 = vpow.pop %v752
        %v754 = vsel %vm347, %v753, 0.0
        %755 = vadd.xlane.f32.xlu0 %v754
        %v756 = vpop.xlane.xlu0 %755
        %v757 = vrcp.pop %v756
        %v758 = vmul.f32 %v753, %v757
        %v759 = vpack.c.bf16 %v758, %v758
        %v761 = vsel %vm347, %v759, 0
        %v764 = vsel %vm409, %v701, 0
        %766 = vmatprep.subr.bf16.mxu0 0
        %767 = vmatpush1.bf16.msra.mxu0 0
        %768 = vmatprep.subr.bf16.mxu0 0
        %769 = vmatpush1.bf16.msra.mxu0 0
        %770 = vmatprep.subr.bf16.mxu0 0
        %771 = vmatpush1.bf16.msra.mxu0 0
        %772 = vmatprep.subr.bf16.mxu0 0
        %773 = vmatpush1.bf16.msra.mxu0 0
        %774 = vmatprep.subr.bf16.mxu0 0
        %775 = vmatpush1.bf16.msra.mxu0 0
        %776 = vmatprep.subr.bf16.mxu0 0
        %777 = vmatpush1.bf16.msra.mxu0 0
        %778 = vmatprep.subr.bf16.mxu0 0
        %779 = vmatpush1.bf16.msra.mxu0 0
        %780 = vmatprep.subr.bf16.mxu0 0
        %781 = vmatpush1.bf16.msra.mxu0 %v764
        %782 = vmatprep.subr.bf16.mxu0 0
        %783 = vmatpush2.bf16.msra.mxu0 0
        %784 = vmatprep.subr.bf16.mxu0 0
        %785 = vmatpush2.bf16.msra.mxu0 0
        %786 = vmatprep.subr.bf16.mxu0 0
        %787 = vmatpush2.bf16.msra.mxu0 0
        %788 = vmatprep.subr.bf16.mxu0 0
        %789 = vmatpush2.bf16.msra.mxu0 0
        %790 = vmatprep.subr.bf16.mxu0 0
        %791 = vmatpush2.bf16.msra.mxu0 0
        %792 = vmatprep.subr.bf16.mxu0 0
        %793 = vmatpush2.bf16.msra.mxu0 0
        %794 = vmatprep.subr.bf16.mxu0 0
        %795 = vmatpush2.bf16.msra.mxu0 0
        %796 = vmatprep.subr.bf16.mxu0 0
        %797 = vmatpush2.bf16.msra.mxu0 0
        %798 = vmatprep.mubr.bf16.mxu0 0
        %799 = vmatmul.mubr.bf16.gmra.mxu0 %v761
        %v800 = vpop.f32.mrf.mxu0
        %v801 = vadd.f32 0.0, %v800
        %v802 = vpop.f32.mrf.mxu0
        %v803 = vpop.f32.mrf.mxu0
        %v804 = vpop.f32.mrf.mxu0
        %805 = vdwg.mxu0
        %v806 = vpack.c.bf16 %v801, %v801
        %v808 = vunpack.c.l.b16 %v806
        %v809 = vpack.c.b16 %v808, %v808
        %810 = vrot.lane.b32.xlu0 %v809, 24
        %v811 = vpop.permute.xlu0 %810
        %vm813 = vcmask 257216
        %814 = vst.msk [vmem:[%s342] sm:$0xf] %vm813, %v811
        %v815 = vadd.f32 %v695, %v758
        %p816 = scmp.eq.s32.totalorder %s26, 0
        // Predicated region
        $region33: #{a_call__.4} parent=31 // pred_check
          %p817 = pneg %p816
        $region34: #{a_call__.4} parent=31 // pred_check_branch
          %819 = sbr.rel (%p817) target = $region36
        $region35: #{a_call__.4} parent=31 // pred_region
          %820 = vst.msk [vmem:[%s299] sm:$0xff] %vm347, 0.0
        $region36: #{a_call__.4} parent=31 // pred_fallthru
          _
        %v821 = vld [vmem:[%s299] sm:$0xff]
        %v822 = vadd.f32 %v821, %v815
        %823 = vst.msk [vmem:[%s299] sm:$0xff] %vm347, %v822
        // Predicated region
        $region37: #{a_call__.4} parent=31 // pred_check
          %p824 = pneg %p816
        $region38: #{a_call__.4} parent=31 // pred_check_branch
          %826 = sbr.rel (%p824) target = $region40
        $region39: #{a_call__.4} parent=31 // pred_region
          %v827 = vld [vmem:[%s299] sm:$0xff]
          %v828 = vmul.f32 %v827, 0.25
          %829 = vst.msk [vmem:[%s299] sm:$0xff] %vm347, %v828
        $region40: #{a_call__.4} parent=31 // pred_fallthru
          _
        %p830 = scmp.lt.s32.totalorder %s24, 1
        %s831 = scalar_select %p830, %s24, 1
        %p832 = scmp.lt.s32.totalorder %s25, 0
        %s833 = scalar_select %p832, %s25, 0
        %p834 = scmp.lt.s32.totalorder %s26, 0
        %s835 = scalar_select %p834, %s26, 0
        %s836 = sadd.s32 %s835, %s833
        %s837 = sadd.s32 %s836, %s831
        %s838 = smul.addr %s837, 4
        %s839 = scalar_lea.vmem %s3, %s838
        %s840 = sand.u32 %s164, 1
        %s841 = scalar_lea.sflag [#allocation3], %s840
        %s842 = sand.u32 %s164, 1
        %s843 = smul.addr %s842, 8
        %s844 = scalar_lea.vmem [#allocation2], %s843
        // Predicated region
        $region41: #{a_call__.4} parent=31 // pred_check
          %p845 = pneg %p146
        $region42: #{a_call__.4} parent=31 // pred_check_branch
          %847 = sbr.rel (%p845) target = $region44
        $region43: #{a_call__.4} parent=31 // pred_region
          _
        $region44: #{a_call__.4} parent=31 // pred_fallthru
          _
        // Predicated region
        $region45: #{a_call__.4} parent=31 // pred_check
          %p848 = pneg %p174
        $region46: #{a_call__.4} parent=31 // pred_check_branch
          %850 = sbr.rel (%p848) target = $region48
        $region47: #{a_call__.4} parent=31 // pred_region
          %s852 = ssub.s32 128, 128
          %853 = vsyncadd %s841, %s852
          %s854 = sadd.s32 %s25, %s24
          %s855 = smul.addr %s854, 128
          %s856 = scalar_lea.hbm %s4, %s855
          %s858 = sshll.u32 %s844, 4
          %s859 = int_to_ptr.vmem [resolvable:$true] %s858
          %861 = dma.vmem_to_hbm [thread:$0]  %s859, 128, %s856, %s841
        $region48: #{a_call__.4} parent=31 // pred_fallthru
          _
      $region32: #{a_call__.4} parent=5 // pred_fallthru
        _
      %p862 = scmp.le.s32.totalorder 2, %s14
      // Predicated region
      $region49: #{a_call__.4} parent=5 // pred_check
        %p863 = pneg %p862
      $region50: #{a_call__.4} parent=5 // pred_check_branch
        %865 = sbr.rel (%p863) target = $region52
      $region51: #{a_call__.4} parent=5 // pred_region
        %s866 = ssub.s32 %s14, 2
        // Predicated region
        $region53: #{a_call__.4} parent=51 // pred_check
          %p867 = pneg %p152
        $region54: #{a_call__.4} parent=51 // pred_check_branch
          %869 = sbr.rel (%p867) target = $region56
        $region55: #{a_call__.4} parent=51 // pred_region
          %p870 = scmp.lt.s32.totalorder %s27, 1
          %s871 = scalar_select %p870, %s27, 1
          %p872 = scmp.lt.s32.totalorder %s28, 0
          %s873 = scalar_select %p872, %s28, 0
          %p874 = scmp.lt.s32.totalorder %s29, 0
          %s875 = scalar_select %p874, %s29, 0
          %s876 = sadd.s32 %s875, %s873
          %s877 = sadd.s32 %s876, %s871
          %s878 = smul.addr %s877, 4
          %s879 = scalar_lea.vmem %s3, %s878
        $region56: #{a_call__.4} parent=51 // pred_fallthru
          _
        // Predicated region
        $region57: #{a_call__.4} parent=51 // pred_check
          %p880 = pneg %p180
        $region58: #{a_call__.4} parent=51 // pred_check_branch
          %882 = sbr.rel (%p880) target = $region60
        $region59: #{a_call__.4} parent=51 // pred_region
          %s883 = sand.u32 %s165, 1
          %s884 = scalar_lea.sflag [#allocation3], %s883
          %s885 = sand.u32 %s165, 1
          %s886 = smul.addr %s885, 8
          %s887 = scalar_lea.vmem [#allocation2], %s886
          %888 = dma.done %s884, 128
        $region60: #{a_call__.4} parent=51 // pred_fallthru
          _
      $region52: #{a_call__.4} parent=5 // pred_fallthru
        _
    $region6: #{a_call__.4} parent=1 // loop_footer
      %s18 = sadd.s32 1, %s14
    $region7: #{a_call__.4} parent=1 // loop_footer_branch
      %13 = sbr.rel target = $region3
    $region8: #{a_call__.4} parent=1 // loop_exit
      _
    %889 = vsyncpa [#allocation3], 1
    %s890 = scalar_lea.sflag [#allocation3], 1
    %891 = vsyncpa %s890, 1

</llo_original>
